<compile_context>
chip_gen: v6e
topology: v6e:2x2x1
jax: 0.10.0
libtpu: 0.0.40
codegen_flags: <defaults>
</compile_context>

<pallas_src>
import math
from functools import partial

import jax
import jax.numpy as jnp
from jax.experimental import pallas as pl
from jax.experimental.pallas import tpu as pltpu


def _default_compute_dtype():
    """bf16 MXU inputs on v6e/v7x (native bf16 path); keep f32 on v5e and older."""
    try:
        kind = jax.devices()[0].device_kind.lower()
    except Exception:
        return jnp.float32
    if ("v6" in kind) or ("v7" in kind) or ("7x" in kind):
        return jnp.bfloat16
    return jnp.float32


def _mha_kernel(x_ref, wqkv_ref, wout_ref, bout_ref, o_ref, *,
                n_heads, seq_len, batch_block, causal):
    """One grid step == `batch_block` full batch elements.

      x_ref    : (bb*T, C)     compute dtype (f32 or bf16)
      wqkv_ref : (3H, C, dh)   compute dtype, head-major [Q heads | K heads | V heads]
      wout_ref : (H, dh, Cp)   compute dtype, head-major, out width padded to 128-mult
      bout_ref : (1, Cp)       float32
      o_ref    : (bb*T, Cp)    float32
    """
    H, T, bb = n_heads, seq_len, batch_block
    N = bb * T
    C = x_ref.shape[-1]
    dh = C // H
    G = H * bb                      # one attention problem per (head, batch-in-block)
    scale = 1.0 / math.sqrt(dh)     # == 1/sqrt(C / n_heads)

    x = x_ref[...]                                      # (N, C)
    cd = x.dtype
    xh = jnp.broadcast_to(x[None], (3 * H, N, C))       # leading-dim broadcast only

    # Fused head-batched QKV projection: ONE batched MXU dot, f32 accumulation.
    qkv = jnp.einsum('gnc,gcd->gnd', xh, wqkv_ref[...],
                     preferred_element_type=jnp.float32)           # (3H, N, dh)
    # Leading-axis (static) slices: no lane movement.
    q = qkv[:H]
    k = qkv[H:2 * H]
    v = qkv[2 * H:]

    # (H, bb*T, dh) -> (H*bb, T, dh): pure re-grouping of whole f32 tiles (T % 8 == 0
    # whenever bb > 1), done in f32 before any bf16 cast so no repacking is needed.
    q = q.reshape(G, T, dh).astype(cd)
    k = k.reshape(G, T, dh).astype(cd)
    v = v.reshape(G, T, dh).astype(cd)

    s = jnp.einsum('gqd,gkd->gqk', q, k, preferred_element_type=jnp.float32) * scale

    if causal:
        # Finite additive mask (no -inf arithmetic / NaN hazard), built once per step.
        row = jax.lax.broadcasted_iota(jnp.int32, (T, T), 0)
        col = jax.lax.broadcasted_iota(jnp.int32, (T, T), 1)
        s = s + jnp.where(col <= row, 0.0, -1e30)

    # Numerically stable softmax; 1/l folded in after p@v via the EUP approx recip.
    m = jnp.max(s, axis=-1, keepdims=True)
    p = jnp.exp(s - m)
    l = jnp.sum(p, axis=-1, keepdims=True)
    # TODO(synk): attention dropout omitted (inference / eval semantics).

    ctx = jnp.einsum('gqk,gkd->gqd', p.astype(cd), v,
                     preferred_element_type=jnp.float32)           # (G, T, dh) f32
    ctx = ctx * pl.reciprocal(l, approx=True)

    # Output projection without a head concatenate: per-head (dh -> Cp) batched matmul
    # followed by a cheap leading-axis sum over heads.
    ctx = ctx.reshape(H, N, dh).astype(cd)               # inverse re-grouping (free)
    out = jnp.einsum('hnd,hdc->hnc', ctx, wout_ref[...],
                     preferred_element_type=jnp.float32)  # (H, N, Cp)
    out = jnp.sum(out, axis=0) + bout_ref[...]            # (N, Cp) + (1, Cp)
    # TODO(synk): residual dropout omitted (inference / eval semantics).
    o_ref[...] = out.astype(o_ref.dtype)


def multi_head_attention(x, w_qkv, w_out, b_out, *, n_heads, causal=True,
                         batch_block=None, compute_dtype=None):
    """x: (B, T, C); w_qkv: (3C, C); w_out: (C, C); b_out: (C,) — PyTorch layouts."""
    B, T, C = x.shape
    H = n_heads
    assert C % H == 0, "d_model must be divisible by n_heads"
    dh = C // H

    cd = _default_compute_dtype() if compute_dtype is None else compute_dtype

    # Fold as many batch elements as possible into one grid step (per-step pipeline
    # overhead dominates at small T*C); when B is large the remaining grid steps are
    # marked "parallel" so v7x's two TensorCores both get work.
    if batch_block is None:
        batch_block = (next(bb for bb in (8, 4, 2, 1) if bb <= B and B % bb == 0)
                       if T % 8 == 0 else 1)
    bb = batch_block
    assert B % bb == 0, "batch_block must divide B"

    # Lane-dense output: pad the out-projection width to a multiple of 128 so the
    # kernel's final store is an unmasked full-lane vst (padding sliced off below).
    C_pad = ((C + 127) // 128) * 128

    w_qkv = jnp.asarray(w_qkv, jnp.float32)
    w_out = jnp.asarray(w_out, jnp.float32)
    b_out = jnp.asarray(b_out, jnp.float32)

    # Head-major weight slabs (done once, wrapper-side) so the kernel never slices,
    # transposes or concatenates along the lane axis. Q/K/V stacked on the leading
    # axis into a single (3H, C, dh) slab for one fused batched matmul in-kernel.
    wq_h = w_qkv[:C].reshape(H, dh, C).transpose(0, 2, 1)                     # (H, C, dh)
    wk_h = w_qkv[C:2 * C].reshape(H, dh, C).transpose(0, 2, 1)                # (H, C, dh)
    wv_h = w_qkv[2 * C:].reshape(H, dh, C).transpose(0, 2, 1)                 # (H, C, dh)
    wqkv_h = jnp.concatenate([wq_h, wk_h, wv_h], axis=0).astype(cd)           # (3H, C, dh)
    wout_h = jnp.pad(w_out.T.reshape(H, dh, C),
                     ((0, 0), (0, 0), (0, C_pad - C))).astype(cd)             # (H, dh, Cp)
    bout = jnp.pad(b_out, (0, C_pad - C)).reshape(1, C_pad)                   # (1, Cp) f32

    x2d = x.reshape(B * T, C).astype(cd)     # fold B into the sublane axis

    kernel = partial(_mha_kernel, n_heads=H, seq_len=T, batch_block=bb, causal=causal)
    n_rows = bb * T

    y_pad = pl.pallas_call(
        kernel,
        out_shape=jax.ShapeDtypeStruct((B * T, C_pad), jnp.float32),
        grid_spec=pltpu.PrefetchScalarGridSpec(
            num_scalar_prefetch=0,
            grid=(B // bb,),
            in_specs=[
                pl.BlockSpec((n_rows, C), lambda i: (i, 0)),
                pl.BlockSpec((3 * H, C, dh), lambda i: (0, 0, 0)),
                pl.BlockSpec((H, dh, C_pad), lambda i: (0, 0, 0)),
                pl.BlockSpec((1, C_pad), lambda i: (0, 0)),
            ],
            out_specs=pl.BlockSpec((n_rows, C_pad), lambda i: (i, 0)),
        ),
        compiler_params=pltpu.CompilerParams(
            dimension_semantics=("parallel",),
        ),
    )(x2d, wqkv_h, wout_h, bout)

    return y_pad[:, :C].reshape(B, T, C)


def _reference(x, w_qkv, w_out, b_out, n_heads):
    """Pure-JAX f32 reference mirroring the PyTorch forward (eval mode, causal)."""
    B, T, C = x.shape
    dh = C // n_heads
    qkv = x @ w_qkv.T                                   # (B, T, 3C)
    q, k, v = jnp.split(qkv, 3, axis=-1)

    def to_heads(t):
        return t.reshape(B, T, n_heads, dh).transpose(0, 2, 1, 3)  # (B, H, T, dh)

    q, k, v = to_heads(q), to_heads(k), to_heads(v)
    scores = (q @ jnp.swapaxes(k, -2, -1)) / math.sqrt(C / n_heads)
    mask = jnp.tril(jnp.ones((T, T), bool))[None, None]
    scores = jnp.where(mask, scores, -jnp.inf)
    p = jax.nn.softmax(scores, axis=-1)
    out = (p @ v).transpose(0, 2, 1, 3).reshape(B, T, C)
    return out @ w_out.T + b_out


if __name__ == "__main__":
    # Small config consistent with the module: n_ctx=8, d_model=32, n_heads=4.
    B, T, C, H = 2, 8, 32, 4

    key = jax.random.PRNGKey(0)
    kx, kqkv, kwo, kbo = jax.random.split(key, 4)

    x = jax.random.normal(kx, (B, T, C), jnp.float32)

    # PyTorch nn.Linear default init: U(-1/sqrt(fan_in), 1/sqrt(fan_in)).
    bound = 1.0 / math.sqrt(C)
    w_qkv = jax.random.uniform(kqkv, (3 * C, C), jnp.float32, -bound, bound)
    w_out = jax.random.uniform(kwo, (C, C), jnp.float32, -bound, bound)
    b_out = jax.random.uniform(kbo, (C,), jnp.float32, -bound, bound)

    y = multi_head_attention(x, w_qkv, w_out, b_out, n_heads=H)
    y = jax.block_until_ready(y)

    y_ref = _reference(x, w_qkv, w_out, b_out, H)
    assert y.shape == (B, T, C)
    # Tolerance covers bf16 MXU inputs (v6e/v7x path) and the EUP approximate
    # reciprocal; structural bugs (mask / head mixing) would be O(0.1-1) off.
    assert jnp.allclose(y, y_ref, atol=5e-2, rtol=5e-2), "mismatch vs reference"

    print("KERNEL_OK")
</pallas_src>

<mosaic_0001>
module attributes {stable_mosaic.version = 11 : i64} {
  func.func @_mha_kernel(%arg0: i32, %arg1: memref<16x32xf32, #tpu.memory_space<vmem>>, %arg2: memref<12x32x8xf32, #tpu.memory_space<vmem>>, %arg3: memref<4x8x128xf32, #tpu.memory_space<vmem>>, %arg4: memref<1x128xf32, #tpu.memory_space<vmem>>, %arg5: memref<16x128xf32, #tpu.memory_space<vmem>>) attributes {dimension_semantics = [#tpu.dimension_semantics<parallel>], iteration_bounds = array<i64: 1>, scalar_prefetch = 0 : i64, scratch_operands = 0 : i64, tpu.core_type = #tpu.core_type<tc>, window_params = [{transform_indices = @transform_0, window_bounds = array<i64: 16, 32>}, {pipeline_mode = #tpu.pipeline_mode<synchronous>, transform_indices = @transform_1, window_bounds = array<i64: 12, 32, 8>}, {pipeline_mode = #tpu.pipeline_mode<synchronous>, transform_indices = @transform_2, window_bounds = array<i64: 4, 8, 128>}, {pipeline_mode = #tpu.pipeline_mode<synchronous>, transform_indices = @transform_3, window_bounds = array<i64: 1, 128>}, {transform_indices = @transform_4, window_bounds = array<i64: 16, 128>}]} {
    %c0 = arith.constant 0 : index
    %c0_0 = arith.constant 0 : index
    %0 = vector.load %arg1[%c0, %c0_0] : memref<16x32xf32, #tpu.memory_space<vmem>>, vector<16x32xf32>
    %1 = vector.shape_cast %0 : vector<16x32xf32> to vector<1x16x32xf32>
    %2 = vector.shape_cast %1 : vector<1x16x32xf32> to vector<1x16x32xf32>
    %3 = vector.broadcast %2 : vector<1x16x32xf32> to vector<12x16x32xf32>
    %c0_1 = arith.constant 0 : index
    %c0_2 = arith.constant 0 : index
    %c0_3 = arith.constant 0 : index
    %4 = vector.load %arg2[%c0_1, %c0_2, %c0_3] : memref<12x32x8xf32, #tpu.memory_space<vmem>>, vector<12x32x8xf32>
    "tpu.trace_start"() <{level = 10 : i32, message = "gnc,gcd->gnd"}> : () -> ()
    %cst = arith.constant dense<0.000000e+00> : vector<12x16x8xf32>
    %5 = tpu.matmul %3, %4, %cst {dimension_numbers = #tpu.dot_dimension_numbers<[2], [1], [1], [2], [0, 0, 0, 1, 1, 2], [0], [0]>} : vector<12x16x32xf32>, vector<12x32x8xf32>, vector<12x16x8xf32> -> vector<12x16x8xf32>
    "tpu.trace_stop"() : () -> ()
    %6 = vector.extract_strided_slice %5 {offsets = [0, 0, 0], sizes = [4, 16, 8], strides = [1, 1, 1]} : vector<12x16x8xf32> to vector<4x16x8xf32>
    %7 = vector.extract_strided_slice %5 {offsets = [4, 0, 0], sizes = [4, 16, 8], strides = [1, 1, 1]} : vector<12x16x8xf32> to vector<4x16x8xf32>
    %8 = vector.extract_strided_slice %5 {offsets = [8, 0, 0], sizes = [4, 16, 8], strides = [1, 1, 1]} : vector<12x16x8xf32> to vector<4x16x8xf32>
    %9 = vector.shape_cast %6 : vector<4x16x8xf32> to vector<8x8x8xf32>
    %10 = vector.shape_cast %7 : vector<4x16x8xf32> to vector<8x8x8xf32>
    %11 = vector.shape_cast %8 : vector<4x16x8xf32> to vector<8x8x8xf32>
    "tpu.trace_start"() <{level = 10 : i32, message = "gqd,gkd->gqk"}> : () -> ()
    %cst_4 = arith.constant dense<0.000000e+00> : vector<8x8x8xf32>
    %12 = tpu.matmul %9, %10, %cst_4 {dimension_numbers = #tpu.dot_dimension_numbers<[2], [2], [1], [1], [0, 0, 0, 1, 1, 1], [0], [0]>} : vector<8x8x8xf32>, vector<8x8x8xf32>, vector<8x8x8xf32> -> vector<8x8x8xf32>
    "tpu.trace_stop"() : () -> ()
    %cst_5 = arith.constant 0.353553385 : f32
    %13 = vector.broadcast %cst_5 : f32 to vector<8x8x8xf32>
    %14 = arith.mulf %12, %13 : vector<8x8x8xf32>
    %15 = tpu.iota {dimensions = array<i32: 0>} : vector<8x8xi32>
    %16 = tpu.iota {dimensions = array<i32: 1>} : vector<8x8xi32>
    %17 = arith.cmpi sle, %16, %15 : vector<8x8xi32>
    %cst_6 = arith.constant 0.000000e+00 : f32
    %cst_7 = arith.constant -1.000000e+30 : f32
    %18 = vector.broadcast %cst_6 : f32 to vector<8x8xf32>
    %19 = vector.broadcast %cst_7 : f32 to vector<8x8xf32>
    %20 = arith.select %17, %18, %19 : vector<8x8xi1>, vector<8x8xf32>
    %21 = vector.shape_cast %20 : vector<8x8xf32> to vector<1x8x8xf32>
    %22 = vector.broadcast %21 : vector<1x8x8xf32> to vector<8x8x8xf32>
    %23 = arith.addf %14, %22 : vector<8x8x8xf32>
    %cst_8 = arith.constant dense<0xFF800000> : vector<8x8xf32>
    %24 = vector.multi_reduction <maximumf>, %23, %cst_8 [2] : vector<8x8x8xf32> to vector<8x8xf32>
    %25 = vector.shape_cast %24 : vector<8x8xf32> to vector<8x8x1xf32>
    %26 = vector.broadcast %25 : vector<8x8x1xf32> to vector<8x8x8xf32>
    %27 = arith.subf %23, %26 : vector<8x8x8xf32>
    %28 = math.exp %27 : vector<8x8x8xf32>
    %cst_9 = arith.constant dense<0.000000e+00> : vector<8x8xf32>
    %29 = vector.multi_reduction <add>, %28, %cst_9 [2] : vector<8x8x8xf32> to vector<8x8xf32>
    %30 = vector.shape_cast %29 : vector<8x8xf32> to vector<8x8x1xf32>
    "tpu.trace_start"() <{level = 10 : i32, message = "gqk,gkd->gqd"}> : () -> ()
    %cst_10 = arith.constant dense<0.000000e+00> : vector<8x8x8xf32>
    %31 = tpu.matmul %28, %11, %cst_10 {dimension_numbers = #tpu.dot_dimension_numbers<[2], [1], [1], [2], [0, 0, 0, 1, 1, 2], [0], [0]>} : vector<8x8x8xf32>, vector<8x8x8xf32>, vector<8x8x8xf32> -> vector<8x8x8xf32>
    "tpu.trace_stop"() : () -> ()
    %32 = tpu.reciprocal %30 {approx = true} : vector<8x8x1xf32> -> vector<8x8x1xf32>
    %33 = vector.broadcast %32 : vector<8x8x1xf32> to vector<8x8x8xf32>
    %34 = arith.mulf %31, %33 : vector<8x8x8xf32>
    %35 = vector.shape_cast %34 : vector<8x8x8xf32> to vector<4x16x8xf32>
    %c0_11 = arith.constant 0 : index
    %c0_12 = arith.constant 0 : index
    %c0_13 = arith.constant 0 : index
    %36 = vector.load %arg3[%c0_11, %c0_12, %c0_13] : memref<4x8x128xf32, #tpu.memory_space<vmem>>, vector<4x8x128xf32>
    "tpu.trace_start"() <{level = 10 : i32, message = "hnd,hdc->hnc"}> : () -> ()
    %cst_14 = arith.constant dense<0.000000e+00> : vector<4x16x128xf32>
    %37 = tpu.matmul %35, %36, %cst_14 {dimension_numbers = #tpu.dot_dimension_numbers<[2], [1], [1], [2], [0, 0, 0, 1, 1, 2], [0], [0]>} : vector<4x16x8xf32>, vector<4x8x128xf32>, vector<4x16x128xf32> -> vector<4x16x128xf32>
    "tpu.trace_stop"() : () -> ()
    %cst_15 = arith.constant dense<0.000000e+00> : vector<16x128xf32>
    %38 = vector.multi_reduction <add>, %37, %cst_15 [0] : vector<4x16x128xf32> to vector<16x128xf32>
    %c0_16 = arith.constant 0 : index
    %c0_17 = arith.constant 0 : index
    %39 = vector.load %arg4[%c0_16, %c0_17] : memref<1x128xf32, #tpu.memory_space<vmem>>, vector<1x128xf32>
    %40 = vector.broadcast %39 : vector<1x128xf32> to vector<16x128xf32>
    %41 = arith.addf %38, %40 : vector<16x128xf32>
    %c0_18 = arith.constant 0 : index
    %c0_19 = arith.constant 0 : index
    %42 = vector.load %arg5[%c0_18, %c0_19] : memref<16x128xf32, #tpu.memory_space<vmem>>, vector<16x128xf32>
    tpu.vector_store %arg5[%c0_18, %c0_19], %41 {strides = array<i32>} : memref<16x128xf32, #tpu.memory_space<vmem>>, vector<16x128xf32>,
    return
  }
  func.func @transform_0(%arg0: i32) -> (i32, i32) {
    %c0_i32 = arith.constant 0 : i32
    %c0_i32_0 = arith.constant 0 : i32
    return %arg0, %c0_i32 : i32, i32
  }
  func.func @transform_1(%arg0: i32) -> (i32, i32, i32) {
    %c0_i32 = arith.constant 0 : i32
    %c0_i32_0 = arith.constant 0 : i32
    %c0_i32_1 = arith.constant 0 : i32
    %c0_i32_2 = arith.constant 0 : i32
    return %c0_i32, %c0_i32_0, %c0_i32_1 : i32, i32, i32
  }
  func.func @transform_2(%arg0: i32) -> (i32, i32, i32) {
    %c0_i32 = arith.constant 0 : i32
    %c0_i32_0 = arith.constant 0 : i32
    %c0_i32_1 = arith.constant 0 : i32
    %c0_i32_2 = arith.constant 0 : i32
    return %c0_i32, %c0_i32_0, %c0_i32_1 : i32, i32, i32
  }
  func.func @transform_3(%arg0: i32) -> (i32, i32) {
    %c0_i32 = arith.constant 0 : i32
    %c0_i32_0 = arith.constant 0 : i32
    %c0_i32_1 = arith.constant 0 : i32
    return %c0_i32, %c0_i32_0 : i32, i32
  }
  func.func @transform_4(%arg0: i32) -> (i32, i32) {
    %c0_i32 = arith.constant 0 : i32
    %c0_i32_0 = arith.constant 0 : i32
    return %arg0, %c0_i32 : i32, i32
  }
}

</mosaic_0001>

<llo_original>
// kernel: tpu_custom_call.1
$region0: #{tpu_custom_call.1}
  #allocation0 [shape = 'u32[]', space=smem, size = 0x4, offset = 0x4, fixed_abs, tag = 'smem constant byte address 0x4 - core index']
  #allocation1 [shape = 'u32[144,128]{1,0:T(1,128)}', space=vmem, size = 0x12000, scoped, tag = 'internal scratch']
  %s0 = inlined_call_operand.vmem [shape: f32[16,32], index: 0, kind: input, shape index: {}]
  %s1 = inlined_call_operand.vmem [shape: f32[12,32,8], index: 1, kind: input, shape index: {}]
  %s2 = inlined_call_operand.vmem [shape: f32[4,8,128], index: 2, kind: input, shape index: {}]
  %s3 = inlined_call_operand.vmem [shape: f32[1,128], index: 3, kind: input, shape index: {}]
  %s4 = inlined_call_operand.hbm [shape: f32[16,128], index: 4, kind: output, shape index: {}]
  %s5 = sld [smem:[#allocation0]]
  $region26: #{tpu_custom_call.1} parent=0
    _
  %s7 = ssub.s32 1, %s5
  %s8 = scalar_select 0, %s7, %s5
  $region1: #{tpu_custom_call.1} parent=0
    #allocation2 [shape = 'u8[8192]{0}', space=vmem, size = 0x2000, scoped, tag = 'output window, operand 0, single buffered']
    #allocation3 [shape = 's32[1]{0}', space=sflag, size = 0x4, scoped, tag = 'scoped memory for tpu_custom_call.1']
    %9 = vsyncpa [#allocation3], 0
    // Predicated region
    $region2: #{tpu_custom_call.1} parent=1 // pred_check
      _
    $region3: #{tpu_custom_call.1} parent=1 // pred_check_branch
      %11 = sbr.rel (0) target = $region5
    $region4: #{tpu_custom_call.1} parent=1 // pred_region
      _
    $region5: #{tpu_custom_call.1} parent=1 // pred_fallthru
      _
    // Predicated region
    $region6: #{tpu_custom_call.1} parent=1 // pred_check
      _
    $region7: #{tpu_custom_call.1} parent=1 // pred_check_branch
      %13 = sbr.rel (0) target = $region9
    $region8: #{tpu_custom_call.1} parent=1 // pred_region
      _
    $region9: #{tpu_custom_call.1} parent=1 // pred_fallthru
      _
    // Predicated region
    $region10: #{tpu_custom_call.1} parent=1 // pred_check
      _
    $region11: #{tpu_custom_call.1} parent=1 // pred_check_branch
      %15 = sbr.rel (0) target = $region13
    $region12: #{tpu_custom_call.1} parent=1 // pred_region
      _
    $region13: #{tpu_custom_call.1} parent=1 // pred_fallthru
      _
    // Predicated region
    $region14: #{tpu_custom_call.1} parent=1 // pred_check
      _
    $region15: #{tpu_custom_call.1} parent=1 // pred_check_branch
      %17 = sbr.rel (0) target = $region17
    $region16: #{tpu_custom_call.1} parent=1 // pred_region
      _
    $region17: #{tpu_custom_call.1} parent=1 // pred_fallthru
      _
    %v18 = vld [vmem:[%s0] sm:$0xff]
    %v19 = vld [vmem:[%s0 + $0x8] sm:$0xff]
    %v20 = vld [vmem:[%s1] sm:$0xff]
    %v21 = vld [vmem:[%s1 + $0x8] sm:$0xff]
    %v22 = vld [vmem:[%s1 + $0x10] sm:$0xff]
    %v23 = vld [vmem:[%s1 + $0x18] sm:$0xff]
    %v24 = vld [vmem:[%s1 + $0x20] sm:$0xff]
    %v25 = vld [vmem:[%s1 + $0x28] sm:$0xff]
    %v26 = vld [vmem:[%s1 + $0x30] sm:$0xff]
    %v27 = vld [vmem:[%s1 + $0x38] sm:$0xff]
    %v28 = vld [vmem:[%s1 + $0x40] sm:$0xff]
    %v29 = vld [vmem:[%s1 + $0x48] sm:$0xff]
    %v30 = vld [vmem:[%s1 + $0x50] sm:$0xff]
    %v31 = vld [vmem:[%s1 + $0x58] sm:$0xff]
    %v32 = vld [vmem:[%s1 + $0x60] sm:$0xff]
    %v33 = vld [vmem:[%s1 + $0x68] sm:$0xff]
    %v34 = vld [vmem:[%s1 + $0x70] sm:$0xff]
    %v35 = vld [vmem:[%s1 + $0x78] sm:$0xff]
    %v36 = vld [vmem:[%s1 + $0x80] sm:$0xff]
    %v37 = vld [vmem:[%s1 + $0x88] sm:$0xff]
    %v38 = vld [vmem:[%s1 + $0x90] sm:$0xff]
    %v39 = vld [vmem:[%s1 + $0x98] sm:$0xff]
    %v40 = vld [vmem:[%s1 + $0xa0] sm:$0xff]
    %v41 = vld [vmem:[%s1 + $0xa8] sm:$0xff]
    %v42 = vld [vmem:[%s1 + $0xb0] sm:$0xff]
    %v43 = vld [vmem:[%s1 + $0xb8] sm:$0xff]
    %v44 = vld [vmem:[%s1 + $0xc0] sm:$0xff]
    %v45 = vld [vmem:[%s1 + $0xc8] sm:$0xff]
    %v46 = vld [vmem:[%s1 + $0xd0] sm:$0xff]
    %v47 = vld [vmem:[%s1 + $0xd8] sm:$0xff]
    %v48 = vld [vmem:[%s1 + $0xe0] sm:$0xff]
    %v49 = vld [vmem:[%s1 + $0xe8] sm:$0xff]
    %v50 = vld [vmem:[%s1 + $0xf0] sm:$0xff]
    %v51 = vld [vmem:[%s1 + $0xf8] sm:$0xff]
    %v52 = vld [vmem:[%s1 + $0x100] sm:$0xff]
    %v53 = vld [vmem:[%s1 + $0x108] sm:$0xff]
    %v54 = vld [vmem:[%s1 + $0x110] sm:$0xff]
    %v55 = vld [vmem:[%s1 + $0x118] sm:$0xff]
    %v56 = vld [vmem:[%s1 + $0x120] sm:$0xff]
    %v57 = vld [vmem:[%s1 + $0x128] sm:$0xff]
    %v58 = vld [vmem:[%s1 + $0x130] sm:$0xff]
    %v59 = vld [vmem:[%s1 + $0x138] sm:$0xff]
    %v60 = vld [vmem:[%s1 + $0x140] sm:$0xff]
    %v61 = vld [vmem:[%s1 + $0x148] sm:$0xff]
    %v62 = vld [vmem:[%s1 + $0x150] sm:$0xff]
    %v63 = vld [vmem:[%s1 + $0x158] sm:$0xff]
    %v64 = vld [vmem:[%s1 + $0x160] sm:$0xff]
    %v65 = vld [vmem:[%s1 + $0x168] sm:$0xff]
    %v66 = vld [vmem:[%s1 + $0x170] sm:$0xff]
    %v67 = vld [vmem:[%s1 + $0x178] sm:$0xff]
    %vm68 = vcmask 261120
    %v70 = vsel %vm68, %v18, 0
    %v73 = vsel %vm68, %v19, 0
    %75 = vmatprep.subr.mxu0 0.0
    %76 = vmatpush1.msra.mxu0 0.0
    %77 = vmatprep.subr.mxu0 0.0
    %78 = vmatpush1.msra.mxu0 0.0
    %79 = vmatprep.subr.mxu0 0.0
    %80 = vmatpush1.msra.mxu0 0.0
    %81 = vmatprep.subr.mxu0 0.0
    %82 = vmatpush1.msra.mxu0 0.0
    %83 = vmatprep.subr.mxu0 0.0
    %84 = vmatpush1.msra.mxu0 0.0
    %85 = vmatprep.subr.mxu0 0.0
    %86 = vmatpush1.msra.mxu0 0.0
    %87 = vmatprep.subr.mxu0 0.0
    %88 = vmatpush1.msra.mxu0 0.0
    %89 = vmatprep.subr.mxu0 0.0
    %90 = vmatpush1.msra.mxu0 0.0
    %91 = vmatprep.subr.mxu0 0.0
    %92 = vmatpush1.msra.mxu0 0.0
    %93 = vmatprep.subr.mxu0 0.0
    %94 = vmatpush1.msra.mxu0 0.0
    %95 = vmatprep.subr.mxu0 0.0
    %96 = vmatpush1.msra.mxu0 0.0
    %97 = vmatprep.subr.mxu0 0.0
    %98 = vmatpush1.msra.mxu0 0.0
    %99 = vmatprep.subr.mxu0 0.0
    %100 = vmatpush1.msra.mxu0 %v23
    %101 = vmatprep.subr.mxu0 0.0
    %102 = vmatpush1.msra.mxu0 %v22
    %103 = vmatprep.subr.mxu0 0.0
    %104 = vmatpush1.msra.mxu0 %v21
    %105 = vmatprep.subr.mxu0 0.0
    %106 = vmatpush1.msra.mxu0 %v20
    %107 = vmatprep.subr.mxu0 0.0
    %108 = vmatpush2.msra.mxu0 0.0
    %109 = vmatprep.subr.mxu0 0.0
    %110 = vmatpush2.msra.mxu0 0.0
    %111 = vmatprep.subr.mxu0 0.0
    %112 = vmatpush2.msra.mxu0 0.0
    %113 = vmatprep.subr.mxu0 0.0
    %114 = vmatpush2.msra.mxu0 0.0
    %115 = vmatprep.subr.mxu0 0.0
    %116 = vmatpush2.msra.mxu0 0.0
    %117 = vmatprep.subr.mxu0 0.0
    %118 = vmatpush2.msra.mxu0 0.0
    %119 = vmatprep.subr.mxu0 0.0
    %120 = vmatpush2.msra.mxu0 0.0
    %121 = vmatprep.subr.mxu0 0.0
    %122 = vmatpush2.msra.mxu0 0.0
    %123 = vmatprep.subr.mxu0 0.0
    %124 = vmatpush2.msra.mxu0 0.0
    %125 = vmatprep.subr.mxu0 0.0
    %126 = vmatpush2.msra.mxu0 0.0
    %127 = vmatprep.subr.mxu0 0.0
    %128 = vmatpush2.msra.mxu0 0.0
    %129 = vmatprep.subr.mxu0 0.0
    %130 = vmatpush2.msra.mxu0 0.0
    %131 = vmatprep.subr.mxu0 0.0
    %132 = vmatpush2.msra.mxu0 0.0
    %133 = vmatprep.subr.mxu0 0.0
    %134 = vmatpush2.msra.mxu0 0.0
    %135 = vmatprep.subr.mxu0 0.0
    %136 = vmatpush2.msra.mxu0 0.0
    %137 = vmatprep.subr.mxu0 0.0
    %138 = vmatpush2.msra.mxu0 0.0
    %139 = vmatprep.mubr.f32.mxu0 0.0
    %140 = vmatmul.mubr.f32.gmra.mxu0 %v70
    %v141 = vpop.f32.mrf.mxu0
    %v142 = vadd.f32 0.0, %v141
    %v143 = vpop.f32.mrf.mxu0
    %144 = vmatprep.mubr.f32.mxu0 0.0
    %145 = vmatmul.mubr.f32.gmra.mxu0 %v73
    %v146 = vpop.f32.mrf.mxu0
    %v147 = vadd.f32 0.0, %v146
    %v148 = vpop.f32.mrf.mxu0
    %149 = vdwg.mxu0
    %150 = vmatprep.subr.mxu0 0.0
    %151 = vmatpush1.msra.mxu0 0.0
    %152 = vmatprep.subr.mxu0 0.0
    %153 = vmatpush1.msra.mxu0 0.0
    %154 = vmatprep.subr.mxu0 0.0
    %155 = vmatpush1.msra.mxu0 0.0
    %156 = vmatprep.subr.mxu0 0.0
    %157 = vmatpush1.msra.mxu0 0.0
    %158 = vmatprep.subr.mxu0 0.0
    %159 = vmatpush1.msra.mxu0 0.0
    %160 = vmatprep.subr.mxu0 0.0
    %161 = vmatpush1.msra.mxu0 0.0
    %162 = vmatprep.subr.mxu0 0.0
    %163 = vmatpush1.msra.mxu0 0.0
    %164 = vmatprep.subr.mxu0 0.0
    %165 = vmatpush1.msra.mxu0 0.0
    %166 = vmatprep.subr.mxu0 0.0
    %167 = vmatpush1.msra.mxu0 0.0
    %168 = vmatprep.subr.mxu0 0.0
    %169 = vmatpush1.msra.mxu0 0.0
    %170 = vmatprep.subr.mxu0 0.0
    %171 = vmatpush1.msra.mxu0 0.0
    %172 = vmatprep.subr.mxu0 0.0
    %173 = vmatpush1.msra.mxu0 0.0
    %174 = vmatprep.subr.mxu0 0.0
    %175 = vmatpush1.msra.mxu0 %v27
    %176 = vmatprep.subr.mxu0 0.0
    %177 = vmatpush1.msra.mxu0 %v26
    %178 = vmatprep.subr.mxu0 0.0
    %179 = vmatpush1.msra.mxu0 %v25
    %180 = vmatprep.subr.mxu0 0.0
    %181 = vmatpush1.msra.mxu0 %v24
    %182 = vmatprep.subr.mxu0 0.0
    %183 = vmatpush2.msra.mxu0 0.0
    %184 = vmatprep.subr.mxu0 0.0
    %185 = vmatpush2.msra.mxu0 0.0
    %186 = vmatprep.subr.mxu0 0.0
    %187 = vmatpush2.msra.mxu0 0.0
    %188 = vmatprep.subr.mxu0 0.0
    %189 = vmatpush2.msra.mxu0 0.0
    %190 = vmatprep.subr.mxu0 0.0
    %191 = vmatpush2.msra.mxu0 0.0
    %192 = vmatprep.subr.mxu0 0.0
    %193 = vmatpush2.msra.mxu0 0.0
    %194 = vmatprep.subr.mxu0 0.0
    %195 = vmatpush2.msra.mxu0 0.0
    %196 = vmatprep.subr.mxu0 0.0
    %197 = vmatpush2.msra.mxu0 0.0
    %198 = vmatprep.subr.mxu0 0.0
    %199 = vmatpush2.msra.mxu0 0.0
    %200 = vmatprep.subr.mxu0 0.0
    %201 = vmatpush2.msra.mxu0 0.0
    %202 = vmatprep.subr.mxu0 0.0
    %203 = vmatpush2.msra.mxu0 0.0
    %204 = vmatprep.subr.mxu0 0.0
    %205 = vmatpush2.msra.mxu0 0.0
    %206 = vmatprep.subr.mxu0 0.0
    %207 = vmatpush2.msra.mxu0 0.0
    %208 = vmatprep.subr.mxu0 0.0
    %209 = vmatpush2.msra.mxu0 0.0
    %210 = vmatprep.subr.mxu0 0.0
    %211 = vmatpush2.msra.mxu0 0.0
    %212 = vmatprep.subr.mxu0 0.0
    %213 = vmatpush2.msra.mxu0 0.0
    %214 = vmatprep.mubr.f32.mxu0 0.0
    %215 = vmatmul.mubr.f32.gmra.mxu0 %v70
    %v216 = vpop.f32.mrf.mxu0
    %v217 = vadd.f32 0.0, %v216
    %v218 = vpop.f32.mrf.mxu0
    %219 = vmatprep.mubr.f32.mxu0 0.0
    %220 = vmatmul.mubr.f32.gmra.mxu0 %v73
    %v221 = vpop.f32.mrf.mxu0
    %v222 = vadd.f32 0.0, %v221
    %v223 = vpop.f32.mrf.mxu0
    %224 = vdwg.mxu0
    %225 = vmatprep.subr.mxu0 0.0
    %226 = vmatpush1.msra.mxu0 0.0
    %227 = vmatprep.subr.mxu0 0.0
    %228 = vmatpush1.msra.mxu0 0.0
    %229 = vmatprep.subr.mxu0 0.0
    %230 = vmatpush1.msra.mxu0 0.0
    %231 = vmatprep.subr.mxu0 0.0
    %232 = vmatpush1.msra.mxu0 0.0
    %233 = vmatprep.subr.mxu0 0.0
    %234 = vmatpush1.msra.mxu0 0.0
    %235 = vmatprep.subr.mxu0 0.0
    %236 = vmatpush1.msra.mxu0 0.0
    %237 = vmatprep.subr.mxu0 0.0
    %238 = vmatpush1.msra.mxu0 0.0
    %239 = vmatprep.subr.mxu0 0.0
    %240 = vmatpush1.msra.mxu0 0.0
    %241 = vmatprep.subr.mxu0 0.0
    %242 = vmatpush1.msra.mxu0 0.0
    %243 = vmatprep.subr.mxu0 0.0
    %244 = vmatpush1.msra.mxu0 0.0
    %245 = vmatprep.subr.mxu0 0.0
    %246 = vmatpush1.msra.mxu0 0.0
    %247 = vmatprep.subr.mxu0 0.0
    %248 = vmatpush1.msra.mxu0 0.0
    %249 = vmatprep.subr.mxu0 0.0
    %250 = vmatpush1.msra.mxu0 %v31
    %251 = vmatprep.subr.mxu0 0.0
    %252 = vmatpush1.msra.mxu0 %v30
    %253 = vmatprep.subr.mxu0 0.0
    %254 = vmatpush1.msra.mxu0 %v29
    %255 = vmatprep.subr.mxu0 0.0
    %256 = vmatpush1.msra.mxu0 %v28
    %257 = vmatprep.subr.mxu0 0.0
    %258 = vmatpush2.msra.mxu0 0.0
    %259 = vmatprep.subr.mxu0 0.0
    %260 = vmatpush2.msra.mxu0 0.0
    %261 = vmatprep.subr.mxu0 0.0
    %262 = vmatpush2.msra.mxu0 0.0
    %263 = vmatprep.subr.mxu0 0.0
    %264 = vmatpush2.msra.mxu0 0.0
    %265 = vmatprep.subr.mxu0 0.0
    %266 = vmatpush2.msra.mxu0 0.0
    %267 = vmatprep.subr.mxu0 0.0
    %268 = vmatpush2.msra.mxu0 0.0
    %269 = vmatprep.subr.mxu0 0.0
    %270 = vmatpush2.msra.mxu0 0.0
    %271 = vmatprep.subr.mxu0 0.0
    %272 = vmatpush2.msra.mxu0 0.0
    %273 = vmatprep.subr.mxu0 0.0
    %274 = vmatpush2.msra.mxu0 0.0
    %275 = vmatprep.subr.mxu0 0.0
    %276 = vmatpush2.msra.mxu0 0.0
    %277 = vmatprep.subr.mxu0 0.0
    %278 = vmatpush2.msra.mxu0 0.0
    %279 = vmatprep.subr.mxu0 0.0
    %280 = vmatpush2.msra.mxu0 0.0
    %281 = vmatprep.subr.mxu0 0.0
    %282 = vmatpush2.msra.mxu0 0.0
    %283 = vmatprep.subr.mxu0 0.0
    %284 = vmatpush2.msra.mxu0 0.0
    %285 = vmatprep.subr.mxu0 0.0
    %286 = vmatpush2.msra.mxu0 0.0
    %287 = vmatprep.subr.mxu0 0.0
    %288 = vmatpush2.msra.mxu0 0.0
    %289 = vmatprep.mubr.f32.mxu0 0.0
    %290 = vmatmul.mubr.f32.gmra.mxu0 %v70
    %v291 = vpop.f32.mrf.mxu0
    %v292 = vadd.f32 0.0, %v291
    %v293 = vpop.f32.mrf.mxu0
    %294 = vmatprep.mubr.f32.mxu0 0.0
    %295 = vmatmul.mubr.f32.gmra.mxu0 %v73
    %v296 = vpop.f32.mrf.mxu0
    %v297 = vadd.f32 0.0, %v296
    %v298 = vpop.f32.mrf.mxu0
    %299 = vdwg.mxu0
    %300 = vmatprep.subr.mxu0 0.0
    %301 = vmatpush1.msra.mxu0 0.0
    %302 = vmatprep.subr.mxu0 0.0
    %303 = vmatpush1.msra.mxu0 0.0
    %304 = vmatprep.subr.mxu0 0.0
    %305 = vmatpush1.msra.mxu0 0.0
    %306 = vmatprep.subr.mxu0 0.0
    %307 = vmatpush1.msra.mxu0 0.0
    %308 = vmatprep.subr.mxu0 0.0
    %309 = vmatpush1.msra.mxu0 0.0
    %310 = vmatprep.subr.mxu0 0.0
    %311 = vmatpush1.msra.mxu0 0.0
    %312 = vmatprep.subr.mxu0 0.0
    %313 = vmatpush1.msra.mxu0 0.0
    %314 = vmatprep.subr.mxu0 0.0
    %315 = vmatpush1.msra.mxu0 0.0
    %316 = vmatprep.subr.mxu0 0.0
    %317 = vmatpush1.msra.mxu0 0.0
    %318 = vmatprep.subr.mxu0 0.0
    %319 = vmatpush1.msra.mxu0 0.0
    %320 = vmatprep.subr.mxu0 0.0
    %321 = vmatpush1.msra.mxu0 0.0
    %322 = vmatprep.subr.mxu0 0.0
    %323 = vmatpush1.msra.mxu0 0.0
    %324 = vmatprep.subr.mxu0 0.0
    %325 = vmatpush1.msra.mxu0 %v35
    %326 = vmatprep.subr.mxu0 0.0
    %327 = vmatpush1.msra.mxu0 %v34
    %328 = vmatprep.subr.mxu0 0.0
    %329 = vmatpush1.msra.mxu0 %v33
    %330 = vmatprep.subr.mxu0 0.0
    %331 = vmatpush1.msra.mxu0 %v32
    %332 = vmatprep.subr.mxu0 0.0
    %333 = vmatpush2.msra.mxu0 0.0
    %334 = vmatprep.subr.mxu0 0.0
    %335 = vmatpush2.msra.mxu0 0.0
    %336 = vmatprep.subr.mxu0 0.0
    %337 = vmatpush2.msra.mxu0 0.0
    %338 = vmatprep.subr.mxu0 0.0
    %339 = vmatpush2.msra.mxu0 0.0
    %340 = vmatprep.subr.mxu0 0.0
    %341 = vmatpush2.msra.mxu0 0.0
    %342 = vmatprep.subr.mxu0 0.0
    %343 = vmatpush2.msra.mxu0 0.0
    %344 = vmatprep.subr.mxu0 0.0
    %345 = vmatpush2.msra.mxu0 0.0
    %346 = vmatprep.subr.mxu0 0.0
    %347 = vmatpush2.msra.mxu0 0.0
    %348 = vmatprep.subr.mxu0 0.0
    %349 = vmatpush2.msra.mxu0 0.0
    %350 = vmatprep.subr.mxu0 0.0
    %351 = vmatpush2.msra.mxu0 0.0
    %352 = vmatprep.subr.mxu0 0.0
    %353 = vmatpush2.msra.mxu0 0.0
    %354 = vmatprep.subr.mxu0 0.0
    %355 = vmatpush2.msra.mxu0 0.0
    %356 = vmatprep.subr.mxu0 0.0
    %357 = vmatpush2.msra.mxu0 0.0
    %358 = vmatprep.subr.mxu0 0.0
    %359 = vmatpush2.msra.mxu0 0.0
    %360 = vmatprep.subr.mxu0 0.0
    %361 = vmatpush2.msra.mxu0 0.0
    %362 = vmatprep.subr.mxu0 0.0
    %363 = vmatpush2.msra.mxu0 0.0
    %364 = vmatprep.mubr.f32.mxu0 0.0
    %365 = vmatmul.mubr.f32.gmra.mxu0 %v70
    %v366 = vpop.f32.mrf.mxu0
    %v367 = vadd.f32 0.0, %v366
    %v368 = vpop.f32.mrf.mxu0
    %369 = vmatprep.mubr.f32.mxu0 0.0
    %370 = vmatmul.mubr.f32.gmra.mxu0 %v73
    %v371 = vpop.f32.mrf.mxu0
    %v372 = vadd.f32 0.0, %v371
    %v373 = vpop.f32.mrf.mxu0
    %374 = vdwg.mxu0
    %375 = vmatprep.subr.mxu0 0.0
    %376 = vmatpush1.msra.mxu0 0.0
    %377 = vmatprep.subr.mxu0 0.0
    %378 = vmatpush1.msra.mxu0 0.0
    %379 = vmatprep.subr.mxu0 0.0
    %380 = vmatpush1.msra.mxu0 0.0
    %381 = vmatprep.subr.mxu0 0.0
    %382 = vmatpush1.msra.mxu0 0.0
    %383 = vmatprep.subr.mxu0 0.0
    %384 = vmatpush1.msra.mxu0 0.0
    %385 = vmatprep.subr.mxu0 0.0
    %386 = vmatpush1.msra.mxu0 0.0
    %387 = vmatprep.subr.mxu0 0.0
    %388 = vmatpush1.msra.mxu0 0.0
    %389 = vmatprep.subr.mxu0 0.0
    %390 = vmatpush1.msra.mxu0 0.0
    %391 = vmatprep.subr.mxu0 0.0
    %392 = vmatpush1.msra.mxu0 0.0
    %393 = vmatprep.subr.mxu0 0.0
    %394 = vmatpush1.msra.mxu0 0.0
    %395 = vmatprep.subr.mxu0 0.0
    %396 = vmatpush1.msra.mxu0 0.0
    %397 = vmatprep.subr.mxu0 0.0
    %398 = vmatpush1.msra.mxu0 0.0
    %399 = vmatprep.subr.mxu0 0.0
    %400 = vmatpush1.msra.mxu0 %v39
    %401 = vmatprep.subr.mxu0 0.0
    %402 = vmatpush1.msra.mxu0 %v38
    %403 = vmatprep.subr.mxu0 0.0
    %404 = vmatpush1.msra.mxu0 %v37
    %405 = vmatprep.subr.mxu0 0.0
    %406 = vmatpush1.msra.mxu0 %v36
    %407 = vmatprep.subr.mxu0 0.0
    %408 = vmatpush2.msra.mxu0 0.0
    %409 = vmatprep.subr.mxu0 0.0
    %410 = vmatpush2.msra.mxu0 0.0
    %411 = vmatprep.subr.mxu0 0.0
    %412 = vmatpush2.msra.mxu0 0.0
    %413 = vmatprep.subr.mxu0 0.0
    %414 = vmatpush2.msra.mxu0 0.0
    %415 = vmatprep.subr.mxu0 0.0
    %416 = vmatpush2.msra.mxu0 0.0
    %417 = vmatprep.subr.mxu0 0.0
    %418 = vmatpush2.msra.mxu0 0.0
    %419 = vmatprep.subr.mxu0 0.0
    %420 = vmatpush2.msra.mxu0 0.0
    %421 = vmatprep.subr.mxu0 0.0
    %422 = vmatpush2.msra.mxu0 0.0
    %423 = vmatprep.subr.mxu0 0.0
    %424 = vmatpush2.msra.mxu0 0.0
    %425 = vmatprep.subr.mxu0 0.0
    %426 = vmatpush2.msra.mxu0 0.0
    %427 = vmatprep.subr.mxu0 0.0
    %428 = vmatpush2.msra.mxu0 0.0
    %429 = vmatprep.subr.mxu0 0.0
    %430 = vmatpush2.msra.mxu0 0.0
    %431 = vmatprep.subr.mxu0 0.0
    %432 = vmatpush2.msra.mxu0 0.0
    %433 = vmatprep.subr.mxu0 0.0
    %434 = vmatpush2.msra.mxu0 0.0
    %435 = vmatprep.subr.mxu0 0.0
    %436 = vmatpush2.msra.mxu0 0.0
    %437 = vmatprep.subr.mxu0 0.0
    %438 = vmatpush2.msra.mxu0 0.0
    %439 = vmatprep.mubr.f32.mxu0 0.0
    %440 = vmatmul.mubr.f32.gmra.mxu0 %v70
    %v441 = vpop.f32.mrf.mxu0
    %v442 = vadd.f32 0.0, %v441
    %v443 = vpop.f32.mrf.mxu0
    %444 = vmatprep.mubr.f32.mxu0 0.0
    %445 = vmatmul.mubr.f32.gmra.mxu0 %v73
    %v446 = vpop.f32.mrf.mxu0
    %v447 = vadd.f32 0.0, %v446
    %v448 = vpop.f32.mrf.mxu0
    %449 = vdwg.mxu0
    %450 = vmatprep.subr.mxu0 0.0
    %451 = vmatpush1.msra.mxu0 0.0
    %452 = vmatprep.subr.mxu0 0.0
    %453 = vmatpush1.msra.mxu0 0.0
    %454 = vmatprep.subr.mxu0 0.0
    %455 = vmatpush1.msra.mxu0 0.0
    %456 = vmatprep.subr.mxu0 0.0
    %457 = vmatpush1.msra.mxu0 0.0
    %458 = vmatprep.subr.mxu0 0.0
    %459 = vmatpush1.msra.mxu0 0.0
    %460 = vmatprep.subr.mxu0 0.0
    %461 = vmatpush1.msra.mxu0 0.0
    %462 = vmatprep.subr.mxu0 0.0
    %463 = vmatpush1.msra.mxu0 0.0
    %464 = vmatprep.subr.mxu0 0.0
    %465 = vmatpush1.msra.mxu0 0.0
    %466 = vmatprep.subr.mxu0 0.0
    %467 = vmatpush1.msra.mxu0 0.0
    %468 = vmatprep.subr.mxu0 0.0
    %469 = vmatpush1.msra.mxu0 0.0
    %470 = vmatprep.subr.mxu0 0.0
    %471 = vmatpush1.msra.mxu0 0.0
    %472 = vmatprep.subr.mxu0 0.0
    %473 = vmatpush1.msra.mxu0 0.0
    %474 = vmatprep.subr.mxu0 0.0
    %475 = vmatpush1.msra.mxu0 %v43
    %476 = vmatprep.subr.mxu0 0.0
    %477 = vmatpush1.msra.mxu0 %v42
    %478 = vmatprep.subr.mxu0 0.0
    %479 = vmatpush1.msra.mxu0 %v41
    %480 = vmatprep.subr.mxu0 0.0
    %481 = vmatpush1.msra.mxu0 %v40
    %482 = vmatprep.subr.mxu0 0.0
    %483 = vmatpush2.msra.mxu0 0.0
    %484 = vmatprep.subr.mxu0 0.0
    %485 = vmatpush2.msra.mxu0 0.0
    %486 = vmatprep.subr.mxu0 0.0
    %487 = vmatpush2.msra.mxu0 0.0
    %488 = vmatprep.subr.mxu0 0.0
    %489 = vmatpush2.msra.mxu0 0.0
    %490 = vmatprep.subr.mxu0 0.0
    %491 = vmatpush2.msra.mxu0 0.0
    %492 = vmatprep.subr.mxu0 0.0
    %493 = vmatpush2.msra.mxu0 0.0
    %494 = vmatprep.subr.mxu0 0.0
    %495 = vmatpush2.msra.mxu0 0.0
    %496 = vmatprep.subr.mxu0 0.0
    %497 = vmatpush2.msra.mxu0 0.0
    %498 = vmatprep.subr.mxu0 0.0
    %499 = vmatpush2.msra.mxu0 0.0
    %500 = vmatprep.subr.mxu0 0.0
    %501 = vmatpush2.msra.mxu0 0.0
    %502 = vmatprep.subr.mxu0 0.0
    %503 = vmatpush2.msra.mxu0 0.0
    %504 = vmatprep.subr.mxu0 0.0
    %505 = vmatpush2.msra.mxu0 0.0
    %506 = vmatprep.subr.mxu0 0.0
    %507 = vmatpush2.msra.mxu0 0.0
    %508 = vmatprep.subr.mxu0 0.0
    %509 = vmatpush2.msra.mxu0 0.0
    %510 = vmatprep.subr.mxu0 0.0
    %511 = vmatpush2.msra.mxu0 0.0
    %512 = vmatprep.subr.mxu0 0.0
    %513 = vmatpush2.msra.mxu0 0.0
    %514 = vmatprep.mubr.f32.mxu0 0.0
    %515 = vmatmul.mubr.f32.gmra.mxu0 %v70
    %v516 = vpop.f32.mrf.mxu0
    %v517 = vadd.f32 0.0, %v516
    %v518 = vpop.f32.mrf.mxu0
    %519 = vmatprep.mubr.f32.mxu0 0.0
    %520 = vmatmul.mubr.f32.gmra.mxu0 %v73
    %v521 = vpop.f32.mrf.mxu0
    %v522 = vadd.f32 0.0, %v521
    %v523 = vpop.f32.mrf.mxu0
    %524 = vdwg.mxu0
    %525 = vmatprep.subr.mxu0 0.0
    %526 = vmatpush1.msra.mxu0 0.0
    %527 = vmatprep.subr.mxu0 0.0
    %528 = vmatpush1.msra.mxu0 0.0
    %529 = vmatprep.subr.mxu0 0.0
    %530 = vmatpush1.msra.mxu0 0.0
    %531 = vmatprep.subr.mxu0 0.0
    %532 = vmatpush1.msra.mxu0 0.0
    %533 = vmatprep.subr.mxu0 0.0
    %534 = vmatpush1.msra.mxu0 0.0
    %535 = vmatprep.subr.mxu0 0.0
    %536 = vmatpush1.msra.mxu0 0.0
    %537 = vmatprep.subr.mxu0 0.0
    %538 = vmatpush1.msra.mxu0 0.0
    %539 = vmatprep.subr.mxu0 0.0
    %540 = vmatpush1.msra.mxu0 0.0
    %541 = vmatprep.subr.mxu0 0.0
    %542 = vmatpush1.msra.mxu0 0.0
    %543 = vmatprep.subr.mxu0 0.0
    %544 = vmatpush1.msra.mxu0 0.0
    %545 = vmatprep.subr.mxu0 0.0
    %546 = vmatpush1.msra.mxu0 0.0
    %547 = vmatprep.subr.mxu0 0.0
    %548 = vmatpush1.msra.mxu0 0.0
    %549 = vmatprep.subr.mxu0 0.0
    %550 = vmatpush1.msra.mxu0 %v47
    %551 = vmatprep.subr.mxu0 0.0
    %552 = vmatpush1.msra.mxu0 %v46
    %553 = vmatprep.subr.mxu0 0.0
    %554 = vmatpush1.msra.mxu0 %v45
    %555 = vmatprep.subr.mxu0 0.0
    %556 = vmatpush1.msra.mxu0 %v44
    %557 = vmatprep.subr.mxu0 0.0
    %558 = vmatpush2.msra.mxu0 0.0
    %559 = vmatprep.subr.mxu0 0.0
    %560 = vmatpush2.msra.mxu0 0.0
    %561 = vmatprep.subr.mxu0 0.0
    %562 = vmatpush2.msra.mxu0 0.0
    %563 = vmatprep.subr.mxu0 0.0
    %564 = vmatpush2.msra.mxu0 0.0
    %565 = vmatprep.subr.mxu0 0.0
    %566 = vmatpush2.msra.mxu0 0.0
    %567 = vmatprep.subr.mxu0 0.0
    %568 = vmatpush2.msra.mxu0 0.0
    %569 = vmatprep.subr.mxu0 0.0
    %570 = vmatpush2.msra.mxu0 0.0
    %571 = vmatprep.subr.mxu0 0.0
    %572 = vmatpush2.msra.mxu0 0.0
    %573 = vmatprep.subr.mxu0 0.0
    %574 = vmatpush2.msra.mxu0 0.0
    %575 = vmatprep.subr.mxu0 0.0
    %576 = vmatpush2.msra.mxu0 0.0
    %577 = vmatprep.subr.mxu0 0.0
    %578 = vmatpush2.msra.mxu0 0.0
    %579 = vmatprep.subr.mxu0 0.0
    %580 = vmatpush2.msra.mxu0 0.0
    %581 = vmatprep.subr.mxu0 0.0
    %582 = vmatpush2.msra.mxu0 0.0
    %583 = vmatprep.subr.mxu0 0.0
    %584 = vmatpush2.msra.mxu0 0.0
    %585 = vmatprep.subr.mxu0 0.0
    %586 = vmatpush2.msra.mxu0 0.0
    %587 = vmatprep.subr.mxu0 0.0
    %588 = vmatpush2.msra.mxu0 0.0
    %589 = vmatprep.mubr.f32.mxu0 0.0
    %590 = vmatmul.mubr.f32.gmra.mxu0 %v70
    %v591 = vpop.f32.mrf.mxu0
    %v592 = vadd.f32 0.0, %v591
    %v593 = vpop.f32.mrf.mxu0
    %594 = vmatprep.mubr.f32.mxu0 0.0
    %595 = vmatmul.mubr.f32.gmra.mxu0 %v73
    %v596 = vpop.f32.mrf.mxu0
    %v597 = vadd.f32 0.0, %v596
    %v598 = vpop.f32.mrf.mxu0
    %599 = vdwg.mxu0
    %600 = vmatprep.subr.mxu0 0.0
    %601 = vmatpush1.msra.mxu0 0.0
    %602 = vmatprep.subr.mxu0 0.0
    %603 = vmatpush1.msra.mxu0 0.0
    %604 = vmatprep.subr.mxu0 0.0
    %605 = vmatpush1.msra.mxu0 0.0
    %606 = vmatprep.subr.mxu0 0.0
    %607 = vmatpush1.msra.mxu0 0.0
    %608 = vmatprep.subr.mxu0 0.0
    %609 = vmatpush1.msra.mxu0 0.0
    %610 = vmatprep.subr.mxu0 0.0
    %611 = vmatpush1.msra.mxu0 0.0
    %612 = vmatprep.subr.mxu0 0.0
    %613 = vmatpush1.msra.mxu0 0.0
    %614 = vmatprep.subr.mxu0 0.0
    %615 = vmatpush1.msra.mxu0 0.0
    %616 = vmatprep.subr.mxu0 0.0
    %617 = vmatpush1.msra.mxu0 0.0
    %618 = vmatprep.subr.mxu0 0.0
    %619 = vmatpush1.msra.mxu0 0.0
    %620 = vmatprep.subr.mxu0 0.0
    %621 = vmatpush1.msra.mxu0 0.0
    %622 = vmatprep.subr.mxu0 0.0
    %623 = vmatpush1.msra.mxu0 0.0
    %624 = vmatprep.subr.mxu0 0.0
    %625 = vmatpush1.msra.mxu0 %v51
    %626 = vmatprep.subr.mxu0 0.0
    %627 = vmatpush1.msra.mxu0 %v50
    %628 = vmatprep.subr.mxu0 0.0
    %629 = vmatpush1.msra.mxu0 %v49
    %630 = vmatprep.subr.mxu0 0.0
    %631 = vmatpush1.msra.mxu0 %v48
    %632 = vmatprep.subr.mxu0 0.0
    %633 = vmatpush2.msra.mxu0 0.0
    %634 = vmatprep.subr.mxu0 0.0
    %635 = vmatpush2.msra.mxu0 0.0
    %636 = vmatprep.subr.mxu0 0.0
    %637 = vmatpush2.msra.mxu0 0.0
    %638 = vmatprep.subr.mxu0 0.0
    %639 = vmatpush2.msra.mxu0 0.0
    %640 = vmatprep.subr.mxu0 0.0
    %641 = vmatpush2.msra.mxu0 0.0
    %642 = vmatprep.subr.mxu0 0.0
    %643 = vmatpush2.msra.mxu0 0.0
    %644 = vmatprep.subr.mxu0 0.0
    %645 = vmatpush2.msra.mxu0 0.0
    %646 = vmatprep.subr.mxu0 0.0
    %647 = vmatpush2.msra.mxu0 0.0
    %648 = vmatprep.subr.mxu0 0.0
    %649 = vmatpush2.msra.mxu0 0.0
    %650 = vmatprep.subr.mxu0 0.0
    %651 = vmatpush2.msra.mxu0 0.0
    %652 = vmatprep.subr.mxu0 0.0
    %653 = vmatpush2.msra.mxu0 0.0
    %654 = vmatprep.subr.mxu0 0.0
    %655 = vmatpush2.msra.mxu0 0.0
    %656 = vmatprep.subr.mxu0 0.0
    %657 = vmatpush2.msra.mxu0 0.0
    %658 = vmatprep.subr.mxu0 0.0
    %659 = vmatpush2.msra.mxu0 0.0
    %660 = vmatprep.subr.mxu0 0.0
    %661 = vmatpush2.msra.mxu0 0.0
    %662 = vmatprep.subr.mxu0 0.0
    %663 = vmatpush2.msra.mxu0 0.0
    %664 = vmatprep.mubr.f32.mxu0 0.0
    %665 = vmatmul.mubr.f32.gmra.mxu0 %v70
    %v666 = vpop.f32.mrf.mxu0
    %v667 = vadd.f32 0.0, %v666
    %v668 = vpop.f32.mrf.mxu0
    %669 = vmatprep.mubr.f32.mxu0 0.0
    %670 = vmatmul.mubr.f32.gmra.mxu0 %v73
    %v671 = vpop.f32.mrf.mxu0
    %v672 = vadd.f32 0.0, %v671
    %v673 = vpop.f32.mrf.mxu0
    %674 = vdwg.mxu0
    %675 = vmatprep.subr.mxu0 0.0
    %676 = vmatpush1.msra.mxu0 0.0
    %677 = vmatprep.subr.mxu0 0.0
    %678 = vmatpush1.msra.mxu0 0.0
    %679 = vmatprep.subr.mxu0 0.0
    %680 = vmatpush1.msra.mxu0 0.0
    %681 = vmatprep.subr.mxu0 0.0
    %682 = vmatpush1.msra.mxu0 0.0
    %683 = vmatprep.subr.mxu0 0.0
    %684 = vmatpush1.msra.mxu0 0.0
    %685 = vmatprep.subr.mxu0 0.0
    %686 = vmatpush1.msra.mxu0 0.0
    %687 = vmatprep.subr.mxu0 0.0
    %688 = vmatpush1.msra.mxu0 0.0
    %689 = vmatprep.subr.mxu0 0.0
    %690 = vmatpush1.msra.mxu0 0.0
    %691 = vmatprep.subr.mxu0 0.0
    %692 = vmatpush1.msra.mxu0 0.0
    %693 = vmatprep.subr.mxu0 0.0
    %694 = vmatpush1.msra.mxu0 0.0
    %695 = vmatprep.subr.mxu0 0.0
    %696 = vmatpush1.msra.mxu0 0.0
    %697 = vmatprep.subr.mxu0 0.0
    %698 = vmatpush1.msra.mxu0 0.0
    %699 = vmatprep.subr.mxu0 0.0
    %700 = vmatpush1.msra.mxu0 %v55
    %701 = vmatprep.subr.mxu0 0.0
    %702 = vmatpush1.msra.mxu0 %v54
    %703 = vmatprep.subr.mxu0 0.0
    %704 = vmatpush1.msra.mxu0 %v53
    %705 = vmatprep.subr.mxu0 0.0
    %706 = vmatpush1.msra.mxu0 %v52
    %707 = vmatprep.subr.mxu0 0.0
    %708 = vmatpush2.msra.mxu0 0.0
    %709 = vmatprep.subr.mxu0 0.0
    %710 = vmatpush2.msra.mxu0 0.0
    %711 = vmatprep.subr.mxu0 0.0
    %712 = vmatpush2.msra.mxu0 0.0
    %713 = vmatprep.subr.mxu0 0.0
    %714 = vmatpush2.msra.mxu0 0.0
    %715 = vmatprep.subr.mxu0 0.0
    %716 = vmatpush2.msra.mxu0 0.0
    %717 = vmatprep.subr.mxu0 0.0
    %718 = vmatpush2.msra.mxu0 0.0
    %719 = vmatprep.subr.mxu0 0.0
    %720 = vmatpush2.msra.mxu0 0.0
    %721 = vmatprep.subr.mxu0 0.0
    %722 = vmatpush2.msra.mxu0 0.0
    %723 = vmatprep.subr.mxu0 0.0
    %724 = vmatpush2.msra.mxu0 0.0
    %725 = vmatprep.subr.mxu0 0.0
    %726 = vmatpush2.msra.mxu0 0.0
    %727 = vmatprep.subr.mxu0 0.0
    %728 = vmatpush2.msra.mxu0 0.0
    %729 = vmatprep.subr.mxu0 0.0
    %730 = vmatpush2.msra.mxu0 0.0
    %731 = vmatprep.subr.mxu0 0.0
    %732 = vmatpush2.msra.mxu0 0.0
    %733 = vmatprep.subr.mxu0 0.0
    %734 = vmatpush2.msra.mxu0 0.0
    %735 = vmatprep.subr.mxu0 0.0
    %736 = vmatpush2.msra.mxu0 0.0
    %737 = vmatprep.subr.mxu0 0.0
    %738 = vmatpush2.msra.mxu0 0.0
    %739 = vmatprep.mubr.f32.mxu0 0.0
    %740 = vmatmul.mubr.f32.gmra.mxu0 %v70
    %v741 = vpop.f32.mrf.mxu0
    %v742 = vadd.f32 0.0, %v741
    %v743 = vpop.f32.mrf.mxu0
    %744 = vmatprep.mubr.f32.mxu0 0.0
    %745 = vmatmul.mubr.f32.gmra.mxu0 %v73
    %v746 = vpop.f32.mrf.mxu0
    %v747 = vadd.f32 0.0, %v746
    %v748 = vpop.f32.mrf.mxu0
    %749 = vdwg.mxu0
    %750 = vmatprep.subr.mxu0 0.0
    %751 = vmatpush1.msra.mxu0 0.0
    %752 = vmatprep.subr.mxu0 0.0
    %753 = vmatpush1.msra.mxu0 0.0
    %754 = vmatprep.subr.mxu0 0.0
    %755 = vmatpush1.msra.mxu0 0.0
    %756 = vmatprep.subr.mxu0 0.0
    %757 = vmatpush1.msra.mxu0 0.0
    %758 = vmatprep.subr.mxu0 0.0
    %759 = vmatpush1.msra.mxu0 0.0
    %760 = vmatprep.subr.mxu0 0.0
    %761 = vmatpush1.msra.mxu0 0.0
    %762 = vmatprep.subr.mxu0 0.0
    %763 = vmatpush1.msra.mxu0 0.0
    %764 = vmatprep.subr.mxu0 0.0
    %765 = vmatpush1.msra.mxu0 0.0
    %766 = vmatprep.subr.mxu0 0.0
    %767 = vmatpush1.msra.mxu0 0.0
    %768 = vmatprep.subr.mxu0 0.0
    %769 = vmatpush1.msra.mxu0 0.0
    %770 = vmatprep.subr.mxu0 0.0
    %771 = vmatpush1.msra.mxu0 0.0
    %772 = vmatprep.subr.mxu0 0.0
    %773 = vmatpush1.msra.mxu0 0.0
    %774 = vmatprep.subr.mxu0 0.0
    %775 = vmatpush1.msra.mxu0 %v59
    %776 = vmatprep.subr.mxu0 0.0
    %777 = vmatpush1.msra.mxu0 %v58
    %778 = vmatprep.subr.mxu0 0.0
    %779 = vmatpush1.msra.mxu0 %v57
    %780 = vmatprep.subr.mxu0 0.0
    %781 = vmatpush1.msra.mxu0 %v56
    %782 = vmatprep.subr.mxu0 0.0
    %783 = vmatpush2.msra.mxu0 0.0
    %784 = vmatprep.subr.mxu0 0.0
    %785 = vmatpush2.msra.mxu0 0.0
    %786 = vmatprep.subr.mxu0 0.0
    %787 = vmatpush2.msra.mxu0 0.0
    %788 = vmatprep.subr.mxu0 0.0
    %789 = vmatpush2.msra.mxu0 0.0
    %790 = vmatprep.subr.mxu0 0.0
    %791 = vmatpush2.msra.mxu0 0.0
    %792 = vmatprep.subr.mxu0 0.0
    %793 = vmatpush2.msra.mxu0 0.0
    %794 = vmatprep.subr.mxu0 0.0
    %795 = vmatpush2.msra.mxu0 0.0
    %796 = vmatprep.subr.mxu0 0.0
    %797 = vmatpush2.msra.mxu0 0.0
    %798 = vmatprep.subr.mxu0 0.0
    %799 = vmatpush2.msra.mxu0 0.0
    %800 = vmatprep.subr.mxu0 0.0
    %801 = vmatpush2.msra.mxu0 0.0
    %802 = vmatprep.subr.mxu0 0.0
    %803 = vmatpush2.msra.mxu0 0.0
    %804 = vmatprep.subr.mxu0 0.0
    %805 = vmatpush2.msra.mxu0 0.0
    %806 = vmatprep.subr.mxu0 0.0
    %807 = vmatpush2.msra.mxu0 0.0
    %808 = vmatprep.subr.mxu0 0.0
    %809 = vmatpush2.msra.mxu0 0.0
    %810 = vmatprep.subr.mxu0 0.0
    %811 = vmatpush2.msra.mxu0 0.0
    %812 = vmatprep.subr.mxu0 0.0
    %813 = vmatpush2.msra.mxu0 0.0
    %814 = vmatprep.mubr.f32.mxu0 0.0
    %815 = vmatmul.mubr.f32.gmra.mxu0 %v70
    %v816 = vpop.f32.mrf.mxu0
    %v817 = vadd.f32 0.0, %v816
    %v818 = vpop.f32.mrf.mxu0
    %819 = vmatprep.mubr.f32.mxu0 0.0
    %820 = vmatmul.mubr.f32.gmra.mxu0 %v73
    %v821 = vpop.f32.mrf.mxu0
    %v822 = vadd.f32 0.0, %v821
    %v823 = vpop.f32.mrf.mxu0
    %824 = vdwg.mxu0
    %825 = vmatprep.subr.mxu0 0.0
    %826 = vmatpush1.msra.mxu0 0.0
    %827 = vmatprep.subr.mxu0 0.0
    %828 = vmatpush1.msra.mxu0 0.0
    %829 = vmatprep.subr.mxu0 0.0
    %830 = vmatpush1.msra.mxu0 0.0
    %831 = vmatprep.subr.mxu0 0.0
    %832 = vmatpush1.msra.mxu0 0.0
    %833 = vmatprep.subr.mxu0 0.0
    %834 = vmatpush1.msra.mxu0 0.0
    %835 = vmatprep.subr.mxu0 0.0
    %836 = vmatpush1.msra.mxu0 0.0
    %837 = vmatprep.subr.mxu0 0.0
    %838 = vmatpush1.msra.mxu0 0.0
    %839 = vmatprep.subr.mxu0 0.0
    %840 = vmatpush1.msra.mxu0 0.0
    %841 = vmatprep.subr.mxu0 0.0
    %842 = vmatpush1.msra.mxu0 0.0
    %843 = vmatprep.subr.mxu0 0.0
    %844 = vmatpush1.msra.mxu0 0.0
    %845 = vmatprep.subr.mxu0 0.0
    %846 = vmatpush1.msra.mxu0 0.0
    %847 = vmatprep.subr.mxu0 0.0
    %848 = vmatpush1.msra.mxu0 0.0
    %849 = vmatprep.subr.mxu0 0.0
    %850 = vmatpush1.msra.mxu0 %v63
    %851 = vmatprep.subr.mxu0 0.0
    %852 = vmatpush1.msra.mxu0 %v62
    %853 = vmatprep.subr.mxu0 0.0
    %854 = vmatpush1.msra.mxu0 %v61
    %855 = vmatprep.subr.mxu0 0.0
    %856 = vmatpush1.msra.mxu0 %v60
    %857 = vmatprep.subr.mxu0 0.0
    %858 = vmatpush2.msra.mxu0 0.0
    %859 = vmatprep.subr.mxu0 0.0
    %860 = vmatpush2.msra.mxu0 0.0
    %861 = vmatprep.subr.mxu0 0.0
    %862 = vmatpush2.msra.mxu0 0.0
    %863 = vmatprep.subr.mxu0 0.0
    %864 = vmatpush2.msra.mxu0 0.0
    %865 = vmatprep.subr.mxu0 0.0
    %866 = vmatpush2.msra.mxu0 0.0
    %867 = vmatprep.subr.mxu0 0.0
    %868 = vmatpush2.msra.mxu0 0.0
    %869 = vmatprep.subr.mxu0 0.0
    %870 = vmatpush2.msra.mxu0 0.0
    %871 = vmatprep.subr.mxu0 0.0
    %872 = vmatpush2.msra.mxu0 0.0
    %873 = vmatprep.subr.mxu0 0.0
    %874 = vmatpush2.msra.mxu0 0.0
    %875 = vmatprep.subr.mxu0 0.0
    %876 = vmatpush2.msra.mxu0 0.0
    %877 = vmatprep.subr.mxu0 0.0
    %878 = vmatpush2.msra.mxu0 0.0
    %879 = vmatprep.subr.mxu0 0.0
    %880 = vmatpush2.msra.mxu0 0.0
    %881 = vmatprep.subr.mxu0 0.0
    %882 = vmatpush2.msra.mxu0 0.0
    %883 = vmatprep.subr.mxu0 0.0
    %884 = vmatpush2.msra.mxu0 0.0
    %885 = vmatprep.subr.mxu0 0.0
    %886 = vmatpush2.msra.mxu0 0.0
    %887 = vmatprep.subr.mxu0 0.0
    %888 = vmatpush2.msra.mxu0 0.0
    %889 = vmatprep.mubr.f32.mxu0 0.0
    %890 = vmatmul.mubr.f32.gmra.mxu0 %v70
    %v891 = vpop.f32.mrf.mxu0
    %v892 = vadd.f32 0.0, %v891
    %v893 = vpop.f32.mrf.mxu0
    %894 = vmatprep.mubr.f32.mxu0 0.0
    %895 = vmatmul.mubr.f32.gmra.mxu0 %v73
    %v896 = vpop.f32.mrf.mxu0
    %v897 = vadd.f32 0.0, %v896
    %v898 = vpop.f32.mrf.mxu0
    %899 = vdwg.mxu0
    %900 = vmatprep.subr.mxu0 0.0
    %901 = vmatpush1.msra.mxu0 0.0
    %902 = vmatprep.subr.mxu0 0.0
    %903 = vmatpush1.msra.mxu0 0.0
    %904 = vmatprep.subr.mxu0 0.0
    %905 = vmatpush1.msra.mxu0 0.0
    %906 = vmatprep.subr.mxu0 0.0
    %907 = vmatpush1.msra.mxu0 0.0
    %908 = vmatprep.subr.mxu0 0.0
    %909 = vmatpush1.msra.mxu0 0.0
    %910 = vmatprep.subr.mxu0 0.0
    %911 = vmatpush1.msra.mxu0 0.0
    %912 = vmatprep.subr.mxu0 0.0
    %913 = vmatpush1.msra.mxu0 0.0
    %914 = vmatprep.subr.mxu0 0.0
    %915 = vmatpush1.msra.mxu0 0.0
    %916 = vmatprep.subr.mxu0 0.0
    %917 = vmatpush1.msra.mxu0 0.0
    %918 = vmatprep.subr.mxu0 0.0
    %919 = vmatpush1.msra.mxu0 0.0
    %920 = vmatprep.subr.mxu0 0.0
    %921 = vmatpush1.msra.mxu0 0.0
    %922 = vmatprep.subr.mxu0 0.0
    %923 = vmatpush1.msra.mxu0 0.0
    %924 = vmatprep.subr.mxu0 0.0
    %925 = vmatpush1.msra.mxu0 %v67
    %926 = vmatprep.subr.mxu0 0.0
    %927 = vmatpush1.msra.mxu0 %v66
    %928 = vmatprep.subr.mxu0 0.0
    %929 = vmatpush1.msra.mxu0 %v65
    %930 = vmatprep.subr.mxu0 0.0
    %931 = vmatpush1.msra.mxu0 %v64
    %932 = vmatprep.subr.mxu0 0.0
    %933 = vmatpush2.msra.mxu0 0.0
    %934 = vmatprep.subr.mxu0 0.0
    %935 = vmatpush2.msra.mxu0 0.0
    %936 = vmatprep.subr.mxu0 0.0
    %937 = vmatpush2.msra.mxu0 0.0
    %938 = vmatprep.subr.mxu0 0.0
    %939 = vmatpush2.msra.mxu0 0.0
    %940 = vmatprep.subr.mxu0 0.0
    %941 = vmatpush2.msra.mxu0 0.0
    %942 = vmatprep.subr.mxu0 0.0
    %943 = vmatpush2.msra.mxu0 0.0
    %944 = vmatprep.subr.mxu0 0.0
    %945 = vmatpush2.msra.mxu0 0.0
    %946 = vmatprep.subr.mxu0 0.0
    %947 = vmatpush2.msra.mxu0 0.0
    %948 = vmatprep.subr.mxu0 0.0
    %949 = vmatpush2.msra.mxu0 0.0
    %950 = vmatprep.subr.mxu0 0.0
    %951 = vmatpush2.msra.mxu0 0.0
    %952 = vmatprep.subr.mxu0 0.0
    %953 = vmatpush2.msra.mxu0 0.0
    %954 = vmatprep.subr.mxu0 0.0
    %955 = vmatpush2.msra.mxu0 0.0
    %956 = vmatprep.subr.mxu0 0.0
    %957 = vmatpush2.msra.mxu0 0.0
    %958 = vmatprep.subr.mxu0 0.0
    %959 = vmatpush2.msra.mxu0 0.0
    %960 = vmatprep.subr.mxu0 0.0
    %961 = vmatpush2.msra.mxu0 0.0
    %962 = vmatprep.subr.mxu0 0.0
    %963 = vmatpush2.msra.mxu0 0.0
    %964 = vmatprep.mubr.f32.mxu0 0.0
    %965 = vmatmul.mubr.f32.gmra.mxu0 %v70
    %v966 = vpop.f32.mrf.mxu0
    %v967 = vadd.f32 0.0, %v966
    %v968 = vpop.f32.mrf.mxu0
    %969 = vmatprep.mubr.f32.mxu0 0.0
    %970 = vmatmul.mubr.f32.gmra.mxu0 %v73
    %v971 = vpop.f32.mrf.mxu0
    %v972 = vadd.f32 0.0, %v971
    %v973 = vpop.f32.mrf.mxu0
    %974 = vdwg.mxu0
    %vm975 = vcmask 64512
    %v977 = vsel %vm975, %v142, 0
    %v980 = vsel %vm975, %v442, 0
    %982 = vmatprep.subr.mxu0 0.0
    %983 = vmatpush1.xpose.msra.mxu0 0.0
    %984 = vmatprep.subr.mxu0 0.0
    %985 = vmatpush1.xpose.msra.mxu0 0.0
    %986 = vmatprep.subr.mxu0 0.0
    %987 = vmatpush1.xpose.msra.mxu0 0.0
    %988 = vmatprep.subr.mxu0 0.0
    %989 = vmatpush1.xpose.msra.mxu0 0.0
    %990 = vmatprep.subr.mxu0 0.0
    %991 = vmatpush1.xpose.msra.mxu0 0.0
    %992 = vmatprep.subr.mxu0 0.0
    %993 = vmatpush1.xpose.msra.mxu0 0.0
    %994 = vmatprep.subr.mxu0 0.0
    %995 = vmatpush1.xpose.msra.mxu0 0.0
    %996 = vmatprep.subr.mxu0 0.0
    %997 = vmatpush1.xpose.msra.mxu0 0.0
    %998 = vmatprep.subr.mxu0 0.0
    %999 = vmatpush1.xpose.msra.mxu0 0.0
    %1000 = vmatprep.subr.mxu0 0.0
    %1001 = vmatpush1.xpose.msra.mxu0 0.0
    %1002 = vmatprep.subr.mxu0 0.0
    %1003 = vmatpush1.xpose.msra.mxu0 0.0
    %1004 = vmatprep.subr.mxu0 0.0
    %1005 = vmatpush1.xpose.msra.mxu0 0.0
    %1006 = vmatprep.subr.mxu0 0.0
    %1007 = vmatpush1.xpose.msra.mxu0 0.0
    %1008 = vmatprep.subr.mxu0 0.0
    %1009 = vmatpush1.xpose.msra.mxu0 0.0
    %1010 = vmatprep.subr.mxu0 0.0
    %1011 = vmatpush1.xpose.msra.mxu0 0.0
    %1012 = vmatprep.subr.mxu0 0.0
    %1013 = vmatpush1.xpose.msra.mxu0 %v980
    %1014 = vmatprep.subr.mxu0 0.0
    %1015 = vmatpush2.xpose.msra.mxu0 0.0
    %1016 = vmatprep.subr.mxu0 0.0
    %1017 = vmatpush2.xpose.msra.mxu0 0.0
    %1018 = vmatprep.subr.mxu0 0.0
    %1019 = vmatpush2.xpose.msra.mxu0 0.0
    %1020 = vmatprep.subr.mxu0 0.0
    %1021 = vmatpush2.xpose.msra.mxu0 0.0
    %1022 = vmatprep.subr.mxu0 0.0
    %1023 = vmatpush2.xpose.msra.mxu0 0.0
    %1024 = vmatprep.subr.mxu0 0.0
    %1025 = vmatpush2.xpose.msra.mxu0 0.0
    %1026 = vmatprep.subr.mxu0 0.0
    %1027 = vmatpush2.xpose.msra.mxu0 0.0
    %1028 = vmatprep.subr.mxu0 0.0
    %1029 = vmatpush2.xpose.msra.mxu0 0.0
    %1030 = vmatprep.subr.mxu0 0.0
    %1031 = vmatpush2.xpose.msra.mxu0 0.0
    %1032 = vmatprep.subr.mxu0 0.0
    %1033 = vmatpush2.xpose.msra.mxu0 0.0
    %1034 = vmatprep.subr.mxu0 0.0
    %1035 = vmatpush2.xpose.msra.mxu0 0.0
    %1036 = vmatprep.subr.mxu0 0.0
    %1037 = vmatpush2.xpose.msra.mxu0 0.0
    %1038 = vmatprep.subr.mxu0 0.0
    %1039 = vmatpush2.xpose.msra.mxu0 0.0
    %1040 = vmatprep.subr.mxu0 0.0
    %1041 = vmatpush2.xpose.msra.mxu0 0.0
    %1042 = vmatprep.subr.mxu0 0.0
    %1043 = vmatpush2.xpose.msra.mxu0 0.0
    %1044 = vmatprep.subr.mxu0 0.0
    %1045 = vmatpush2.xpose.msra.mxu0 0.0
    %1046 = vmatprep.mubr.f32.mxu0 0.0
    %1047 = vmatmul.mubr.f32.gmra.mxu0 %v977
    %v1048 = vpop.f32.mrf.mxu0
    %v1049 = vadd.f32 0.0, %v1048
    %v1050 = vpop.f32.mrf.mxu0
    %1051 = vdwg.mxu0
    %v1053 = vsel %vm975, %v147, 0
    %v1056 = vsel %vm975, %v447, 0
    %1058 = vmatprep.subr.mxu0 0.0
    %1059 = vmatpush1.xpose.msra.mxu0 0.0
    %1060 = vmatprep.subr.mxu0 0.0
    %1061 = vmatpush1.xpose.msra.mxu0 0.0
    %1062 = vmatprep.subr.mxu0 0.0
    %1063 = vmatpush1.xpose.msra.mxu0 0.0
    %1064 = vmatprep.subr.mxu0 0.0
    %1065 = vmatpush1.xpose.msra.mxu0 0.0
    %1066 = vmatprep.subr.mxu0 0.0
    %1067 = vmatpush1.xpose.msra.mxu0 0.0
    %1068 = vmatprep.subr.mxu0 0.0
    %1069 = vmatpush1.xpose.msra.mxu0 0.0
    %1070 = vmatprep.subr.mxu0 0.0
    %1071 = vmatpush1.xpose.msra.mxu0 0.0
    %1072 = vmatprep.subr.mxu0 0.0
    %1073 = vmatpush1.xpose.msra.mxu0 0.0
    %1074 = vmatprep.subr.mxu0 0.0
    %1075 = vmatpush1.xpose.msra.mxu0 0.0
    %1076 = vmatprep.subr.mxu0 0.0
    %1077 = vmatpush1.xpose.msra.mxu0 0.0
    %1078 = vmatprep.subr.mxu0 0.0
    %1079 = vmatpush1.xpose.msra.mxu0 0.0
    %1080 = vmatprep.subr.mxu0 0.0
    %1081 = vmatpush1.xpose.msra.mxu0 0.0
    %1082 = vmatprep.subr.mxu0 0.0
    %1083 = vmatpush1.xpose.msra.mxu0 0.0
    %1084 = vmatprep.subr.mxu0 0.0
    %1085 = vmatpush1.xpose.msra.mxu0 0.0
    %1086 = vmatprep.subr.mxu0 0.0
    %1087 = vmatpush1.xpose.msra.mxu0 0.0
    %1088 = vmatprep.subr.mxu0 0.0
    %1089 = vmatpush1.xpose.msra.mxu0 %v1056
    %1090 = vmatprep.subr.mxu0 0.0
    %1091 = vmatpush2.xpose.msra.mxu0 0.0
    %1092 = vmatprep.subr.mxu0 0.0
    %1093 = vmatpush2.xpose.msra.mxu0 0.0
    %1094 = vmatprep.subr.mxu0 0.0
    %1095 = vmatpush2.xpose.msra.mxu0 0.0
    %1096 = vmatprep.subr.mxu0 0.0
    %1097 = vmatpush2.xpose.msra.mxu0 0.0
    %1098 = vmatprep.subr.mxu0 0.0
    %1099 = vmatpush2.xpose.msra.mxu0 0.0
    %1100 = vmatprep.subr.mxu0 0.0
    %1101 = vmatpush2.xpose.msra.mxu0 0.0
    %1102 = vmatprep.subr.mxu0 0.0
    %1103 = vmatpush2.xpose.msra.mxu0 0.0
    %1104 = vmatprep.subr.mxu0 0.0
    %1105 = vmatpush2.xpose.msra.mxu0 0.0
    %1106 = vmatprep.subr.mxu0 0.0
    %1107 = vmatpush2.xpose.msra.mxu0 0.0
    %1108 = vmatprep.subr.mxu0 0.0
    %1109 = vmatpush2.xpose.msra.mxu0 0.0
    %1110 = vmatprep.subr.mxu0 0.0
    %1111 = vmatpush2.xpose.msra.mxu0 0.0
    %1112 = vmatprep.subr.mxu0 0.0
    %1113 = vmatpush2.xpose.msra.mxu0 0.0
    %1114 = vmatprep.subr.mxu0 0.0
    %1115 = vmatpush2.xpose.msra.mxu0 0.0
    %1116 = vmatprep.subr.mxu0 0.0
    %1117 = vmatpush2.xpose.msra.mxu0 0.0
    %1118 = vmatprep.subr.mxu0 0.0
    %1119 = vmatpush2.xpose.msra.mxu0 0.0
    %1120 = vmatprep.subr.mxu0 0.0
    %1121 = vmatpush2.xpose.msra.mxu0 0.0
    %1122 = vmatprep.mubr.f32.mxu0 0.0
    %1123 = vmatmul.mubr.f32.gmra.mxu0 %v1053
    %v1124 = vpop.f32.mrf.mxu0
    %v1125 = vadd.f32 0.0, %v1124
    %v1126 = vpop.f32.mrf.mxu0
    %1127 = vdwg.mxu0
    %v1129 = vsel %vm975, %v217, 0
    %v1132 = vsel %vm975, %v517, 0
    %1134 = vmatprep.subr.mxu0 0.0
    %1135 = vmatpush1.xpose.msra.mxu0 0.0
    %1136 = vmatprep.subr.mxu0 0.0
    %1137 = vmatpush1.xpose.msra.mxu0 0.0
    %1138 = vmatprep.subr.mxu0 0.0
    %1139 = vmatpush1.xpose.msra.mxu0 0.0
    %1140 = vmatprep.subr.mxu0 0.0
    %1141 = vmatpush1.xpose.msra.mxu0 0.0
    %1142 = vmatprep.subr.mxu0 0.0
    %1143 = vmatpush1.xpose.msra.mxu0 0.0
    %1144 = vmatprep.subr.mxu0 0.0
    %1145 = vmatpush1.xpose.msra.mxu0 0.0
    %1146 = vmatprep.subr.mxu0 0.0
    %1147 = vmatpush1.xpose.msra.mxu0 0.0
    %1148 = vmatprep.subr.mxu0 0.0
    %1149 = vmatpush1.xpose.msra.mxu0 0.0
    %1150 = vmatprep.subr.mxu0 0.0
    %1151 = vmatpush1.xpose.msra.mxu0 0.0
    %1152 = vmatprep.subr.mxu0 0.0
    %1153 = vmatpush1.xpose.msra.mxu0 0.0
    %1154 = vmatprep.subr.mxu0 0.0
    %1155 = vmatpush1.xpose.msra.mxu0 0.0
    %1156 = vmatprep.subr.mxu0 0.0
    %1157 = vmatpush1.xpose.msra.mxu0 0.0
    %1158 = vmatprep.subr.mxu0 0.0
    %1159 = vmatpush1.xpose.msra.mxu0 0.0
    %1160 = vmatprep.subr.mxu0 0.0
    %1161 = vmatpush1.xpose.msra.mxu0 0.0
    %1162 = vmatprep.subr.mxu0 0.0
    %1163 = vmatpush1.xpose.msra.mxu0 0.0
    %1164 = vmatprep.subr.mxu0 0.0
    %1165 = vmatpush1.xpose.msra.mxu0 %v1132
    %1166 = vmatprep.subr.mxu0 0.0
    %1167 = vmatpush2.xpose.msra.mxu0 0.0
    %1168 = vmatprep.subr.mxu0 0.0
    %1169 = vmatpush2.xpose.msra.mxu0 0.0
    %1170 = vmatprep.subr.mxu0 0.0
    %1171 = vmatpush2.xpose.msra.mxu0 0.0
    %1172 = vmatprep.subr.mxu0 0.0
    %1173 = vmatpush2.xpose.msra.mxu0 0.0
    %1174 = vmatprep.subr.mxu0 0.0
    %1175 = vmatpush2.xpose.msra.mxu0 0.0
    %1176 = vmatprep.subr.mxu0 0.0
    %1177 = vmatpush2.xpose.msra.mxu0 0.0
    %1178 = vmatprep.subr.mxu0 0.0
    %1179 = vmatpush2.xpose.msra.mxu0 0.0
    %1180 = vmatprep.subr.mxu0 0.0
    %1181 = vmatpush2.xpose.msra.mxu0 0.0
    %1182 = vmatprep.subr.mxu0 0.0
    %1183 = vmatpush2.xpose.msra.mxu0 0.0
    %1184 = vmatprep.subr.mxu0 0.0
    %1185 = vmatpush2.xpose.msra.mxu0 0.0
    %1186 = vmatprep.subr.mxu0 0.0
    %1187 = vmatpush2.xpose.msra.mxu0 0.0
    %1188 = vmatprep.subr.mxu0 0.0
    %1189 = vmatpush2.xpose.msra.mxu0 0.0
    %1190 = vmatprep.subr.mxu0 0.0
    %1191 = vmatpush2.xpose.msra.mxu0 0.0
    %1192 = vmatprep.subr.mxu0 0.0
    %1193 = vmatpush2.xpose.msra.mxu0 0.0
    %1194 = vmatprep.subr.mxu0 0.0
    %1195 = vmatpush2.xpose.msra.mxu0 0.0
    %1196 = vmatprep.subr.mxu0 0.0
    %1197 = vmatpush2.xpose.msra.mxu0 0.0
    %1198 = vmatprep.mubr.f32.mxu0 0.0
    %1199 = vmatmul.mubr.f32.gmra.mxu0 %v1129
    %v1200 = vpop.f32.mrf.mxu0
    %v1201 = vadd.f32 0.0, %v1200
    %v1202 = vpop.f32.mrf.mxu0
    %1203 = vdwg.mxu0
    %v1205 = vsel %vm975, %v222, 0
    %v1208 = vsel %vm975, %v522, 0
    %1210 = vmatprep.subr.mxu0 0.0
    %1211 = vmatpush1.xpose.msra.mxu0 0.0
    %1212 = vmatprep.subr.mxu0 0.0
    %1213 = vmatpush1.xpose.msra.mxu0 0.0
    %1214 = vmatprep.subr.mxu0 0.0
    %1215 = vmatpush1.xpose.msra.mxu0 0.0
    %1216 = vmatprep.subr.mxu0 0.0
    %1217 = vmatpush1.xpose.msra.mxu0 0.0
    %1218 = vmatprep.subr.mxu0 0.0
    %1219 = vmatpush1.xpose.msra.mxu0 0.0
    %1220 = vmatprep.subr.mxu0 0.0
    %1221 = vmatpush1.xpose.msra.mxu0 0.0
    %1222 = vmatprep.subr.mxu0 0.0
    %1223 = vmatpush1.xpose.msra.mxu0 0.0
    %1224 = vmatprep.subr.mxu0 0.0
    %1225 = vmatpush1.xpose.msra.mxu0 0.0
    %1226 = vmatprep.subr.mxu0 0.0
    %1227 = vmatpush1.xpose.msra.mxu0 0.0
    %1228 = vmatprep.subr.mxu0 0.0
    %1229 = vmatpush1.xpose.msra.mxu0 0.0
    %1230 = vmatprep.subr.mxu0 0.0
    %1231 = vmatpush1.xpose.msra.mxu0 0.0
    %1232 = vmatprep.subr.mxu0 0.0
    %1233 = vmatpush1.xpose.msra.mxu0 0.0
    %1234 = vmatprep.subr.mxu0 0.0
    %1235 = vmatpush1.xpose.msra.mxu0 0.0
    %1236 = vmatprep.subr.mxu0 0.0
    %1237 = vmatpush1.xpose.msra.mxu0 0.0
    %1238 = vmatprep.subr.mxu0 0.0
    %1239 = vmatpush1.xpose.msra.mxu0 0.0
    %1240 = vmatprep.subr.mxu0 0.0
    %1241 = vmatpush1.xpose.msra.mxu0 %v1208
    %1242 = vmatprep.subr.mxu0 0.0
    %1243 = vmatpush2.xpose.msra.mxu0 0.0
    %1244 = vmatprep.subr.mxu0 0.0
    %1245 = vmatpush2.xpose.msra.mxu0 0.0
    %1246 = vmatprep.subr.mxu0 0.0
    %1247 = vmatpush2.xpose.msra.mxu0 0.0
    %1248 = vmatprep.subr.mxu0 0.0
    %1249 = vmatpush2.xpose.msra.mxu0 0.0
    %1250 = vmatprep.subr.mxu0 0.0
    %1251 = vmatpush2.xpose.msra.mxu0 0.0
    %1252 = vmatprep.subr.mxu0 0.0
    %1253 = vmatpush2.xpose.msra.mxu0 0.0
    %1254 = vmatprep.subr.mxu0 0.0
    %1255 = vmatpush2.xpose.msra.mxu0 0.0
    %1256 = vmatprep.subr.mxu0 0.0
    %1257 = vmatpush2.xpose.msra.mxu0 0.0
    %1258 = vmatprep.subr.mxu0 0.0
    %1259 = vmatpush2.xpose.msra.mxu0 0.0
    %1260 = vmatprep.subr.mxu0 0.0
    %1261 = vmatpush2.xpose.msra.mxu0 0.0
    %1262 = vmatprep.subr.mxu0 0.0
    %1263 = vmatpush2.xpose.msra.mxu0 0.0
    %1264 = vmatprep.subr.mxu0 0.0
    %1265 = vmatpush2.xpose.msra.mxu0 0.0
    %1266 = vmatprep.subr.mxu0 0.0
    %1267 = vmatpush2.xpose.msra.mxu0 0.0
    %1268 = vmatprep.subr.mxu0 0.0
    %1269 = vmatpush2.xpose.msra.mxu0 0.0
    %1270 = vmatprep.subr.mxu0 0.0
    %1271 = vmatpush2.xpose.msra.mxu0 0.0
    %1272 = vmatprep.subr.mxu0 0.0
    %1273 = vmatpush2.xpose.msra.mxu0 0.0
    %1274 = vmatprep.mubr.f32.mxu0 0.0
    %1275 = vmatmul.mubr.f32.gmra.mxu0 %v1205
    %v1276 = vpop.f32.mrf.mxu0
    %v1277 = vadd.f32 0.0, %v1276
    %v1278 = vpop.f32.mrf.mxu0
    %1279 = vdwg.mxu0
    %v1281 = vsel %vm975, %v292, 0
    %v1284 = vsel %vm975, %v592, 0
    %1286 = vmatprep.subr.mxu0 0.0
    %1287 = vmatpush1.xpose.msra.mxu0 0.0
    %1288 = vmatprep.subr.mxu0 0.0
    %1289 = vmatpush1.xpose.msra.mxu0 0.0
    %1290 = vmatprep.subr.mxu0 0.0
    %1291 = vmatpush1.xpose.msra.mxu0 0.0
    %1292 = vmatprep.subr.mxu0 0.0
    %1293 = vmatpush1.xpose.msra.mxu0 0.0
    %1294 = vmatprep.subr.mxu0 0.0
    %1295 = vmatpush1.xpose.msra.mxu0 0.0
    %1296 = vmatprep.subr.mxu0 0.0
    %1297 = vmatpush1.xpose.msra.mxu0 0.0
    %1298 = vmatprep.subr.mxu0 0.0
    %1299 = vmatpush1.xpose.msra.mxu0 0.0
    %1300 = vmatprep.subr.mxu0 0.0
    %1301 = vmatpush1.xpose.msra.mxu0 0.0
    %1302 = vmatprep.subr.mxu0 0.0
    %1303 = vmatpush1.xpose.msra.mxu0 0.0
    %1304 = vmatprep.subr.mxu0 0.0
    %1305 = vmatpush1.xpose.msra.mxu0 0.0
    %1306 = vmatprep.subr.mxu0 0.0
    %1307 = vmatpush1.xpose.msra.mxu0 0.0
    %1308 = vmatprep.subr.mxu0 0.0
    %1309 = vmatpush1.xpose.msra.mxu0 0.0
    %1310 = vmatprep.subr.mxu0 0.0
    %1311 = vmatpush1.xpose.msra.mxu0 0.0
    %1312 = vmatprep.subr.mxu0 0.0
    %1313 = vmatpush1.xpose.msra.mxu0 0.0
    %1314 = vmatprep.subr.mxu0 0.0
    %1315 = vmatpush1.xpose.msra.mxu0 0.0
    %1316 = vmatprep.subr.mxu0 0.0
    %1317 = vmatpush1.xpose.msra.mxu0 %v1284
    %1318 = vmatprep.subr.mxu0 0.0
    %1319 = vmatpush2.xpose.msra.mxu0 0.0
    %1320 = vmatprep.subr.mxu0 0.0
    %1321 = vmatpush2.xpose.msra.mxu0 0.0
    %1322 = vmatprep.subr.mxu0 0.0
    %1323 = vmatpush2.xpose.msra.mxu0 0.0
    %1324 = vmatprep.subr.mxu0 0.0
    %1325 = vmatpush2.xpose.msra.mxu0 0.0
    %1326 = vmatprep.subr.mxu0 0.0
    %1327 = vmatpush2.xpose.msra.mxu0 0.0
    %1328 = vmatprep.subr.mxu0 0.0
    %1329 = vmatpush2.xpose.msra.mxu0 0.0
    %1330 = vmatprep.subr.mxu0 0.0
    %1331 = vmatpush2.xpose.msra.mxu0 0.0
    %1332 = vmatprep.subr.mxu0 0.0
    %1333 = vmatpush2.xpose.msra.mxu0 0.0
    %1334 = vmatprep.subr.mxu0 0.0
    %1335 = vmatpush2.xpose.msra.mxu0 0.0
    %1336 = vmatprep.subr.mxu0 0.0
    %1337 = vmatpush2.xpose.msra.mxu0 0.0
    %1338 = vmatprep.subr.mxu0 0.0
    %1339 = vmatpush2.xpose.msra.mxu0 0.0
    %1340 = vmatprep.subr.mxu0 0.0
    %1341 = vmatpush2.xpose.msra.mxu0 0.0
    %1342 = vmatprep.subr.mxu0 0.0
    %1343 = vmatpush2.xpose.msra.mxu0 0.0
    %1344 = vmatprep.subr.mxu0 0.0
    %1345 = vmatpush2.xpose.msra.mxu0 0.0
    %1346 = vmatprep.subr.mxu0 0.0
    %1347 = vmatpush2.xpose.msra.mxu0 0.0
    %1348 = vmatprep.subr.mxu0 0.0
    %1349 = vmatpush2.xpose.msra.mxu0 0.0
    %1350 = vmatprep.mubr.f32.mxu0 0.0
    %1351 = vmatmul.mubr.f32.gmra.mxu0 %v1281
    %v1352 = vpop.f32.mrf.mxu0
    %v1353 = vadd.f32 0.0, %v1352
    %v1354 = vpop.f32.mrf.mxu0
    %1355 = vdwg.mxu0
    %v1357 = vsel %vm975, %v297, 0
    %v1360 = vsel %vm975, %v597, 0
    %1362 = vmatprep.subr.mxu0 0.0
    %1363 = vmatpush1.xpose.msra.mxu0 0.0
    %1364 = vmatprep.subr.mxu0 0.0
    %1365 = vmatpush1.xpose.msra.mxu0 0.0
    %1366 = vmatprep.subr.mxu0 0.0
    %1367 = vmatpush1.xpose.msra.mxu0 0.0
    %1368 = vmatprep.subr.mxu0 0.0
    %1369 = vmatpush1.xpose.msra.mxu0 0.0
    %1370 = vmatprep.subr.mxu0 0.0
    %1371 = vmatpush1.xpose.msra.mxu0 0.0
    %1372 = vmatprep.subr.mxu0 0.0
    %1373 = vmatpush1.xpose.msra.mxu0 0.0
    %1374 = vmatprep.subr.mxu0 0.0
    %1375 = vmatpush1.xpose.msra.mxu0 0.0
    %1376 = vmatprep.subr.mxu0 0.0
    %1377 = vmatpush1.xpose.msra.mxu0 0.0
    %1378 = vmatprep.subr.mxu0 0.0
    %1379 = vmatpush1.xpose.msra.mxu0 0.0
    %1380 = vmatprep.subr.mxu0 0.0
    %1381 = vmatpush1.xpose.msra.mxu0 0.0
    %1382 = vmatprep.subr.mxu0 0.0
    %1383 = vmatpush1.xpose.msra.mxu0 0.0
    %1384 = vmatprep.subr.mxu0 0.0
    %1385 = vmatpush1.xpose.msra.mxu0 0.0
    %1386 = vmatprep.subr.mxu0 0.0
    %1387 = vmatpush1.xpose.msra.mxu0 0.0
    %1388 = vmatprep.subr.mxu0 0.0
    %1389 = vmatpush1.xpose.msra.mxu0 0.0
    %1390 = vmatprep.subr.mxu0 0.0
    %1391 = vmatpush1.xpose.msra.mxu0 0.0
    %1392 = vmatprep.subr.mxu0 0.0
    %1393 = vmatpush1.xpose.msra.mxu0 %v1360
    %1394 = vmatprep.subr.mxu0 0.0
    %1395 = vmatpush2.xpose.msra.mxu0 0.0
    %1396 = vmatprep.subr.mxu0 0.0
    %1397 = vmatpush2.xpose.msra.mxu0 0.0
    %1398 = vmatprep.subr.mxu0 0.0
    %1399 = vmatpush2.xpose.msra.mxu0 0.0
    %1400 = vmatprep.subr.mxu0 0.0
    %1401 = vmatpush2.xpose.msra.mxu0 0.0
    %1402 = vmatprep.subr.mxu0 0.0
    %1403 = vmatpush2.xpose.msra.mxu0 0.0
    %1404 = vmatprep.subr.mxu0 0.0
    %1405 = vmatpush2.xpose.msra.mxu0 0.0
    %1406 = vmatprep.subr.mxu0 0.0
    %1407 = vmatpush2.xpose.msra.mxu0 0.0
    %1408 = vmatprep.subr.mxu0 0.0
    %1409 = vmatpush2.xpose.msra.mxu0 0.0
    %1410 = vmatprep.subr.mxu0 0.0
    %1411 = vmatpush2.xpose.msra.mxu0 0.0
    %1412 = vmatprep.subr.mxu0 0.0
    %1413 = vmatpush2.xpose.msra.mxu0 0.0
    %1414 = vmatprep.subr.mxu0 0.0
    %1415 = vmatpush2.xpose.msra.mxu0 0.0
    %1416 = vmatprep.subr.mxu0 0.0
    %1417 = vmatpush2.xpose.msra.mxu0 0.0
    %1418 = vmatprep.subr.mxu0 0.0
    %1419 = vmatpush2.xpose.msra.mxu0 0.0
    %1420 = vmatprep.subr.mxu0 0.0
    %1421 = vmatpush2.xpose.msra.mxu0 0.0
    %1422 = vmatprep.subr.mxu0 0.0
    %1423 = vmatpush2.xpose.msra.mxu0 0.0
    %1424 = vmatprep.subr.mxu0 0.0
    %1425 = vmatpush2.xpose.msra.mxu0 0.0
    %1426 = vmatprep.mubr.f32.mxu0 0.0
    %1427 = vmatmul.mubr.f32.gmra.mxu0 %v1357
    %v1428 = vpop.f32.mrf.mxu0
    %v1429 = vadd.f32 0.0, %v1428
    %v1430 = vpop.f32.mrf.mxu0
    %1431 = vdwg.mxu0
    %v1433 = vsel %vm975, %v367, 0
    %v1436 = vsel %vm975, %v667, 0
    %1438 = vmatprep.subr.mxu0 0.0
    %1439 = vmatpush1.xpose.msra.mxu0 0.0
    %1440 = vmatprep.subr.mxu0 0.0
    %1441 = vmatpush1.xpose.msra.mxu0 0.0
    %1442 = vmatprep.subr.mxu0 0.0
    %1443 = vmatpush1.xpose.msra.mxu0 0.0
    %1444 = vmatprep.subr.mxu0 0.0
    %1445 = vmatpush1.xpose.msra.mxu0 0.0
    %1446 = vmatprep.subr.mxu0 0.0
    %1447 = vmatpush1.xpose.msra.mxu0 0.0
    %1448 = vmatprep.subr.mxu0 0.0
    %1449 = vmatpush1.xpose.msra.mxu0 0.0
    %1450 = vmatprep.subr.mxu0 0.0
    %1451 = vmatpush1.xpose.msra.mxu0 0.0
    %1452 = vmatprep.subr.mxu0 0.0
    %1453 = vmatpush1.xpose.msra.mxu0 0.0
    %1454 = vmatprep.subr.mxu0 0.0
    %1455 = vmatpush1.xpose.msra.mxu0 0.0
    %1456 = vmatprep.subr.mxu0 0.0
    %1457 = vmatpush1.xpose.msra.mxu0 0.0
    %1458 = vmatprep.subr.mxu0 0.0
    %1459 = vmatpush1.xpose.msra.mxu0 0.0
    %1460 = vmatprep.subr.mxu0 0.0
    %1461 = vmatpush1.xpose.msra.mxu0 0.0
    %1462 = vmatprep.subr.mxu0 0.0
    %1463 = vmatpush1.xpose.msra.mxu0 0.0
    %1464 = vmatprep.subr.mxu0 0.0
    %1465 = vmatpush1.xpose.msra.mxu0 0.0
    %1466 = vmatprep.subr.mxu0 0.0
    %1467 = vmatpush1.xpose.msra.mxu0 0.0
    %1468 = vmatprep.subr.mxu0 0.0
    %1469 = vmatpush1.xpose.msra.mxu0 %v1436
    %1470 = vmatprep.subr.mxu0 0.0
    %1471 = vmatpush2.xpose.msra.mxu0 0.0
    %1472 = vmatprep.subr.mxu0 0.0
    %1473 = vmatpush2.xpose.msra.mxu0 0.0
    %1474 = vmatprep.subr.mxu0 0.0
    %1475 = vmatpush2.xpose.msra.mxu0 0.0
    %1476 = vmatprep.subr.mxu0 0.0
    %1477 = vmatpush2.xpose.msra.mxu0 0.0
    %1478 = vmatprep.subr.mxu0 0.0
    %1479 = vmatpush2.xpose.msra.mxu0 0.0
    %1480 = vmatprep.subr.mxu0 0.0
    %1481 = vmatpush2.xpose.msra.mxu0 0.0
    %1482 = vmatprep.subr.mxu0 0.0
    %1483 = vmatpush2.xpose.msra.mxu0 0.0
    %1484 = vmatprep.subr.mxu0 0.0
    %1485 = vmatpush2.xpose.msra.mxu0 0.0
    %1486 = vmatprep.subr.mxu0 0.0
    %1487 = vmatpush2.xpose.msra.mxu0 0.0
    %1488 = vmatprep.subr.mxu0 0.0
    %1489 = vmatpush2.xpose.msra.mxu0 0.0
    %1490 = vmatprep.subr.mxu0 0.0
    %1491 = vmatpush2.xpose.msra.mxu0 0.0
    %1492 = vmatprep.subr.mxu0 0.0
    %1493 = vmatpush2.xpose.msra.mxu0 0.0
    %1494 = vmatprep.subr.mxu0 0.0
    %1495 = vmatpush2.xpose.msra.mxu0 0.0
    %1496 = vmatprep.subr.mxu0 0.0
    %1497 = vmatpush2.xpose.msra.mxu0 0.0
    %1498 = vmatprep.subr.mxu0 0.0
    %1499 = vmatpush2.xpose.msra.mxu0 0.0
    %1500 = vmatprep.subr.mxu0 0.0
    %1501 = vmatpush2.xpose.msra.mxu0 0.0
    %1502 = vmatprep.mubr.f32.mxu0 0.0
    %1503 = vmatmul.mubr.f32.gmra.mxu0 %v1433
    %v1504 = vpop.f32.mrf.mxu0
    %v1505 = vadd.f32 0.0, %v1504
    %v1506 = vpop.f32.mrf.mxu0
    %1507 = vdwg.mxu0
    %v1509 = vsel %vm975, %v372, 0
    %v1512 = vsel %vm975, %v672, 0
    %1514 = vmatprep.subr.mxu0 0.0
    %1515 = vmatpush1.xpose.msra.mxu0 0.0
    %1516 = vmatprep.subr.mxu0 0.0
    %1517 = vmatpush1.xpose.msra.mxu0 0.0
    %1518 = vmatprep.subr.mxu0 0.0
    %1519 = vmatpush1.xpose.msra.mxu0 0.0
    %1520 = vmatprep.subr.mxu0 0.0
    %1521 = vmatpush1.xpose.msra.mxu0 0.0
    %1522 = vmatprep.subr.mxu0 0.0
    %1523 = vmatpush1.xpose.msra.mxu0 0.0
    %1524 = vmatprep.subr.mxu0 0.0
    %1525 = vmatpush1.xpose.msra.mxu0 0.0
    %1526 = vmatprep.subr.mxu0 0.0
    %1527 = vmatpush1.xpose.msra.mxu0 0.0
    %1528 = vmatprep.subr.mxu0 0.0
    %1529 = vmatpush1.xpose.msra.mxu0 0.0
    %1530 = vmatprep.subr.mxu0 0.0
    %1531 = vmatpush1.xpose.msra.mxu0 0.0
    %1532 = vmatprep.subr.mxu0 0.0
    %1533 = vmatpush1.xpose.msra.mxu0 0.0
    %1534 = vmatprep.subr.mxu0 0.0
    %1535 = vmatpush1.xpose.msra.mxu0 0.0
    %1536 = vmatprep.subr.mxu0 0.0
    %1537 = vmatpush1.xpose.msra.mxu0 0.0
    %1538 = vmatprep.subr.mxu0 0.0
    %1539 = vmatpush1.xpose.msra.mxu0 0.0
    %1540 = vmatprep.subr.mxu0 0.0
    %1541 = vmatpush1.xpose.msra.mxu0 0.0
    %1542 = vmatprep.subr.mxu0 0.0
    %1543 = vmatpush1.xpose.msra.mxu0 0.0
    %1544 = vmatprep.subr.mxu0 0.0
    %1545 = vmatpush1.xpose.msra.mxu0 %v1512
    %1546 = vmatprep.subr.mxu0 0.0
    %1547 = vmatpush2.xpose.msra.mxu0 0.0
    %1548 = vmatprep.subr.mxu0 0.0
    %1549 = vmatpush2.xpose.msra.mxu0 0.0
    %1550 = vmatprep.subr.mxu0 0.0
    %1551 = vmatpush2.xpose.msra.mxu0 0.0
    %1552 = vmatprep.subr.mxu0 0.0
    %1553 = vmatpush2.xpose.msra.mxu0 0.0
    %1554 = vmatprep.subr.mxu0 0.0
    %1555 = vmatpush2.xpose.msra.mxu0 0.0
    %1556 = vmatprep.subr.mxu0 0.0
    %1557 = vmatpush2.xpose.msra.mxu0 0.0
    %1558 = vmatprep.subr.mxu0 0.0
    %1559 = vmatpush2.xpose.msra.mxu0 0.0
    %1560 = vmatprep.subr.mxu0 0.0
    %1561 = vmatpush2.xpose.msra.mxu0 0.0
    %1562 = vmatprep.subr.mxu0 0.0
    %1563 = vmatpush2.xpose.msra.mxu0 0.0
    %1564 = vmatprep.subr.mxu0 0.0
    %1565 = vmatpush2.xpose.msra.mxu0 0.0
    %1566 = vmatprep.subr.mxu0 0.0
    %1567 = vmatpush2.xpose.msra.mxu0 0.0
    %1568 = vmatprep.subr.mxu0 0.0
    %1569 = vmatpush2.xpose.msra.mxu0 0.0
    %1570 = vmatprep.subr.mxu0 0.0
    %1571 = vmatpush2.xpose.msra.mxu0 0.0
    %1572 = vmatprep.subr.mxu0 0.0
    %1573 = vmatpush2.xpose.msra.mxu0 0.0
    %1574 = vmatprep.subr.mxu0 0.0
    %1575 = vmatpush2.xpose.msra.mxu0 0.0
    %1576 = vmatprep.subr.mxu0 0.0
    %1577 = vmatpush2.xpose.msra.mxu0 0.0
    %1578 = vmatprep.mubr.f32.mxu0 0.0
    %1579 = vmatmul.mubr.f32.gmra.mxu0 %v1509
    %v1580 = vpop.f32.mrf.mxu0
    %v1581 = vadd.f32 0.0, %v1580
    %v1582 = vpop.f32.mrf.mxu0
    %1583 = vdwg.mxu0
    %v1584 = vmul.f32 %v1049, 0.35355338
    %v1585 = vmul.f32 %v1125, 0.35355338
    %v1586 = vmul.f32 %v1201, 0.35355338
    %v1587 = vmul.f32 %v1277, 0.35355338
    %v1588 = vmul.f32 %v1353, 0.35355338
    %v1589 = vmul.f32 %v1429, 0.35355338
    %v1590 = vmul.f32 %v1505, 0.35355338
    %v1591 = vmul.f32 %v1581, 0.35355338
    %v1592 = vlaneseq
    %v1593 = vshrl.u32 %v1592, 7
    %v1594 = vlaneseq
    %v1595 = vand.u32 %v1594, 127
    %vm1596 = vcmp.le.s32.totalorder %v1595, %v1593
    %v1597 = vsel %vm1596, 0.0, -1e+30
    %v1598 = vadd.f32 %v1584, %v1597
    %v1599 = vadd.f32 %v1585, %v1597
    %v1600 = vadd.f32 %v1586, %v1597
    %v1601 = vadd.f32 %v1587, %v1597
    %v1602 = vadd.f32 %v1588, %v1597
    %v1603 = vadd.f32 %v1589, %v1597
    %v1604 = vadd.f32 %v1590, %v1597
    %v1605 = vadd.f32 %v1591, %v1597
    %v1606 = vsel %vm975, %v1598, -inf
    %1607 = vmax.xlane.f32.xlu0 %v1606
    %v1608 = vpop.xlane.xlu0 %1607
    %v1609 = vsel %vm975, %v1599, -inf
    %1610 = vmax.xlane.f32.xlu0 %v1609
    %v1611 = vpop.xlane.xlu0 %1610
    %v1612 = vsel %vm975, %v1600, -inf
    %1613 = vmax.xlane.f32.xlu0 %v1612
    %v1614 = vpop.xlane.xlu0 %1613
    %v1615 = vsel %vm975, %v1601, -inf
    %1616 = vmax.xlane.f32.xlu0 %v1615
    %v1617 = vpop.xlane.xlu0 %1616
    %v1618 = vsel %vm975, %v1602, -inf
    %1619 = vmax.xlane.f32.xlu0 %v1618
    %v1620 = vpop.xlane.xlu0 %1619
    %v1621 = vsel %vm975, %v1603, -inf
    %1622 = vmax.xlane.f32.xlu0 %v1621
    %v1623 = vpop.xlane.xlu0 %1622
    %v1624 = vsel %vm975, %v1604, -inf
    %1625 = vmax.xlane.f32.xlu0 %v1624
    %v1626 = vpop.xlane.xlu0 %1625
    %v1627 = vsel %vm975, %v1605, -inf
    %1628 = vmax.xlane.f32.xlu0 %v1627
    %v1629 = vpop.xlane.xlu0 %1628
    %v1630 = vsub.f32 %v1598, %v1608
    %v1631 = vsub.f32 %v1599, %v1611
    %v1632 = vsub.f32 %v1600, %v1614
    %v1633 = vsub.f32 %v1601, %v1617
    %v1634 = vsub.f32 %v1602, %v1620
    %v1635 = vsub.f32 %v1603, %v1623
    %v1636 = vsub.f32 %v1604, %v1626
    %v1637 = vsub.f32 %v1605, %v1629
    %v1638 = vmul.f32 %v1630, 1.442695
    %v1639 = vpow.pop %v1638
    %v1640 = vmul.f32 %v1631, 1.442695
    %v1641 = vpow.pop %v1640
    %v1642 = vmul.f32 %v1632, 1.442695
    %v1643 = vpow.pop %v1642
    %v1644 = vmul.f32 %v1633, 1.442695
    %v1645 = vpow.pop %v1644
    %v1646 = vmul.f32 %v1634, 1.442695
    %v1647 = vpow.pop %v1646
    %v1648 = vmul.f32 %v1635, 1.442695
    %v1649 = vpow.pop %v1648
    %v1650 = vmul.f32 %v1636, 1.442695
    %v1651 = vpow.pop %v1650
    %v1652 = vmul.f32 %v1637, 1.442695
    %v1653 = vpow.pop %v1652
    %v1654 = vsel %vm975, %v1639, 0.0
    %1655 = vadd.xlane.f32.xlu0 %v1654
    %v1656 = vpop.xlane.xlu0 %1655
    %v1657 = vsel %vm975, %v1641, 0.0
    %1658 = vadd.xlane.f32.xlu0 %v1657
    %v1659 = vpop.xlane.xlu0 %1658
    %v1660 = vsel %vm975, %v1643, 0.0
    %1661 = vadd.xlane.f32.xlu0 %v1660
    %v1662 = vpop.xlane.xlu0 %1661
    %v1663 = vsel %vm975, %v1645, 0.0
    %1664 = vadd.xlane.f32.xlu0 %v1663
    %v1665 = vpop.xlane.xlu0 %1664
    %v1666 = vsel %vm975, %v1647, 0.0
    %1667 = vadd.xlane.f32.xlu0 %v1666
    %v1668 = vpop.xlane.xlu0 %1667
    %v1669 = vsel %vm975, %v1649, 0.0
    %1670 = vadd.xlane.f32.xlu0 %v1669
    %v1671 = vpop.xlane.xlu0 %1670
    %v1672 = vsel %vm975, %v1651, 0.0
    %1673 = vadd.xlane.f32.xlu0 %v1672
    %v1674 = vpop.xlane.xlu0 %1673
    %v1675 = vsel %vm975, %v1653, 0.0
    %1676 = vadd.xlane.f32.xlu0 %v1675
    %v1677 = vpop.xlane.xlu0 %1676
    %v1679 = vsel %vm975, %v1639, 0
    %1681 = vmatprep.subr.mxu0 0.0
    %1682 = vmatpush1.msra.mxu0 0.0
    %1683 = vmatprep.subr.mxu0 0.0
    %1684 = vmatpush1.msra.mxu0 0.0
    %1685 = vmatprep.subr.mxu0 0.0
    %1686 = vmatpush1.msra.mxu0 0.0
    %1687 = vmatprep.subr.mxu0 0.0
    %1688 = vmatpush1.msra.mxu0 0.0
    %1689 = vmatprep.subr.mxu0 0.0
    %1690 = vmatpush1.msra.mxu0 0.0
    %1691 = vmatprep.subr.mxu0 0.0
    %1692 = vmatpush1.msra.mxu0 0.0
    %1693 = vmatprep.subr.mxu0 0.0
    %1694 = vmatpush1.msra.mxu0 0.0
    %1695 = vmatprep.subr.mxu0 0.0
    %1696 = vmatpush1.msra.mxu0 0.0
    %1697 = vmatprep.subr.mxu0 0.0
    %1698 = vmatpush1.msra.mxu0 0.0
    %1699 = vmatprep.subr.mxu0 0.0
    %1700 = vmatpush1.msra.mxu0 0.0
    %1701 = vmatprep.subr.mxu0 0.0
    %1702 = vmatpush1.msra.mxu0 0.0
    %1703 = vmatprep.subr.mxu0 0.0
    %1704 = vmatpush1.msra.mxu0 0.0
    %1705 = vmatprep.subr.mxu0 0.0
    %1706 = vmatpush1.msra.mxu0 0.0
    %1707 = vmatprep.subr.mxu0 0.0
    %1708 = vmatpush1.msra.mxu0 0.0
    %1709 = vmatprep.subr.mxu0 0.0
    %1710 = vmatpush1.msra.mxu0 0.0
    %1711 = vmatprep.subr.mxu0 0.0
    %1712 = vmatpush1.msra.mxu0 %v742
    %1713 = vmatprep.subr.mxu0 0.0
    %1714 = vmatpush2.msra.mxu0 0.0
    %1715 = vmatprep.subr.mxu0 0.0
    %1716 = vmatpush2.msra.mxu0 0.0
    %1717 = vmatprep.subr.mxu0 0.0
    %1718 = vmatpush2.msra.mxu0 0.0
    %1719 = vmatprep.subr.mxu0 0.0
    %1720 = vmatpush2.msra.mxu0 0.0
    %1721 = vmatprep.subr.mxu0 0.0
    %1722 = vmatpush2.msra.mxu0 0.0
    %1723 = vmatprep.subr.mxu0 0.0
    %1724 = vmatpush2.msra.mxu0 0.0
    %1725 = vmatprep.subr.mxu0 0.0
    %1726 = vmatpush2.msra.mxu0 0.0
    %1727 = vmatprep.subr.mxu0 0.0
    %1728 = vmatpush2.msra.mxu0 0.0
    %1729 = vmatprep.subr.mxu0 0.0
    %1730 = vmatpush2.msra.mxu0 0.0
    %1731 = vmatprep.subr.mxu0 0.0
    %1732 = vmatpush2.msra.mxu0 0.0
    %1733 = vmatprep.subr.mxu0 0.0
    %1734 = vmatpush2.msra.mxu0 0.0
    %1735 = vmatprep.subr.mxu0 0.0
    %1736 = vmatpush2.msra.mxu0 0.0
    %1737 = vmatprep.subr.mxu0 0.0
    %1738 = vmatpush2.msra.mxu0 0.0
    %1739 = vmatprep.subr.mxu0 0.0
    %1740 = vmatpush2.msra.mxu0 0.0
    %1741 = vmatprep.subr.mxu0 0.0
    %1742 = vmatpush2.msra.mxu0 0.0
    %1743 = vmatprep.subr.mxu0 0.0
    %1744 = vmatpush2.msra.mxu0 0.0
    %1745 = vmatprep.mubr.f32.mxu0 0.0
    %1746 = vmatmul.mubr.f32.gmra.mxu0 %v1679
    %v1747 = vpop.f32.mrf.mxu0
    %v1748 = vadd.f32 0.0, %v1747
    %v1749 = vpop.f32.mrf.mxu0
    %1750 = vdwg.mxu0
    %v1752 = vsel %vm975, %v1641, 0
    %1754 = vmatprep.subr.mxu0 0.0
    %1755 = vmatpush1.msra.mxu0 0.0
    %1756 = vmatprep.subr.mxu0 0.0
    %1757 = vmatpush1.msra.mxu0 0.0
    %1758 = vmatprep.subr.mxu0 0.0
    %1759 = vmatpush1.msra.mxu0 0.0
    %1760 = vmatprep.subr.mxu0 0.0
    %1761 = vmatpush1.msra.mxu0 0.0
    %1762 = vmatprep.subr.mxu0 0.0
    %1763 = vmatpush1.msra.mxu0 0.0
    %1764 = vmatprep.subr.mxu0 0.0
    %1765 = vmatpush1.msra.mxu0 0.0
    %1766 = vmatprep.subr.mxu0 0.0
    %1767 = vmatpush1.msra.mxu0 0.0
    %1768 = vmatprep.subr.mxu0 0.0
    %1769 = vmatpush1.msra.mxu0 0.0
    %1770 = vmatprep.subr.mxu0 0.0
    %1771 = vmatpush1.msra.mxu0 0.0
    %1772 = vmatprep.subr.mxu0 0.0
    %1773 = vmatpush1.msra.mxu0 0.0
    %1774 = vmatprep.subr.mxu0 0.0
    %1775 = vmatpush1.msra.mxu0 0.0
    %1776 = vmatprep.subr.mxu0 0.0
    %1777 = vmatpush1.msra.mxu0 0.0
    %1778 = vmatprep.subr.mxu0 0.0
    %1779 = vmatpush1.msra.mxu0 0.0
    %1780 = vmatprep.subr.mxu0 0.0
    %1781 = vmatpush1.msra.mxu0 0.0
    %1782 = vmatprep.subr.mxu0 0.0
    %1783 = vmatpush1.msra.mxu0 0.0
    %1784 = vmatprep.subr.mxu0 0.0
    %1785 = vmatpush1.msra.mxu0 %v747
    %1786 = vmatprep.subr.mxu0 0.0
    %1787 = vmatpush2.msra.mxu0 0.0
    %1788 = vmatprep.subr.mxu0 0.0
    %1789 = vmatpush2.msra.mxu0 0.0
    %1790 = vmatprep.subr.mxu0 0.0
    %1791 = vmatpush2.msra.mxu0 0.0
    %1792 = vmatprep.subr.mxu0 0.0
    %1793 = vmatpush2.msra.mxu0 0.0
    %1794 = vmatprep.subr.mxu0 0.0
    %1795 = vmatpush2.msra.mxu0 0.0
    %1796 = vmatprep.subr.mxu0 0.0
    %1797 = vmatpush2.msra.mxu0 0.0
    %1798 = vmatprep.subr.mxu0 0.0
    %1799 = vmatpush2.msra.mxu0 0.0
    %1800 = vmatprep.subr.mxu0 0.0
    %1801 = vmatpush2.msra.mxu0 0.0
    %1802 = vmatprep.subr.mxu0 0.0
    %1803 = vmatpush2.msra.mxu0 0.0
    %1804 = vmatprep.subr.mxu0 0.0
    %1805 = vmatpush2.msra.mxu0 0.0
    %1806 = vmatprep.subr.mxu0 0.0
    %1807 = vmatpush2.msra.mxu0 0.0
    %1808 = vmatprep.subr.mxu0 0.0
    %1809 = vmatpush2.msra.mxu0 0.0
    %1810 = vmatprep.subr.mxu0 0.0
    %1811 = vmatpush2.msra.mxu0 0.0
    %1812 = vmatprep.subr.mxu0 0.0
    %1813 = vmatpush2.msra.mxu0 0.0
    %1814 = vmatprep.subr.mxu0 0.0
    %1815 = vmatpush2.msra.mxu0 0.0
    %1816 = vmatprep.subr.mxu0 0.0
    %1817 = vmatpush2.msra.mxu0 0.0
    %1818 = vmatprep.mubr.f32.mxu0 0.0
    %1819 = vmatmul.mubr.f32.gmra.mxu0 %v1752
    %v1820 = vpop.f32.mrf.mxu0
    %v1821 = vadd.f32 0.0, %v1820
    %v1822 = vpop.f32.mrf.mxu0
    %1823 = vdwg.mxu0
    %v1825 = vsel %vm975, %v1643, 0
    %1827 = vmatprep.subr.mxu0 0.0
    %1828 = vmatpush1.msra.mxu0 0.0
    %1829 = vmatprep.subr.mxu0 0.0
    %1830 = vmatpush1.msra.mxu0 0.0
    %1831 = vmatprep.subr.mxu0 0.0
    %1832 = vmatpush1.msra.mxu0 0.0
    %1833 = vmatprep.subr.mxu0 0.0
    %1834 = vmatpush1.msra.mxu0 0.0
    %1835 = vmatprep.subr.mxu0 0.0
    %1836 = vmatpush1.msra.mxu0 0.0
    %1837 = vmatprep.subr.mxu0 0.0
    %1838 = vmatpush1.msra.mxu0 0.0
    %1839 = vmatprep.subr.mxu0 0.0
    %1840 = vmatpush1.msra.mxu0 0.0
    %1841 = vmatprep.subr.mxu0 0.0
    %1842 = vmatpush1.msra.mxu0 0.0
    %1843 = vmatprep.subr.mxu0 0.0
    %1844 = vmatpush1.msra.mxu0 0.0
    %1845 = vmatprep.subr.mxu0 0.0
    %1846 = vmatpush1.msra.mxu0 0.0
    %1847 = vmatprep.subr.mxu0 0.0
    %1848 = vmatpush1.msra.mxu0 0.0
    %1849 = vmatprep.subr.mxu0 0.0
    %1850 = vmatpush1.msra.mxu0 0.0
    %1851 = vmatprep.subr.mxu0 0.0
    %1852 = vmatpush1.msra.mxu0 0.0
    %1853 = vmatprep.subr.mxu0 0.0
    %1854 = vmatpush1.msra.mxu0 0.0
    %1855 = vmatprep.subr.mxu0 0.0
    %1856 = vmatpush1.msra.mxu0 0.0
    %1857 = vmatprep.subr.mxu0 0.0
    %1858 = vmatpush1.msra.mxu0 %v817
    %1859 = vmatprep.subr.mxu0 0.0
    %1860 = vmatpush2.msra.mxu0 0.0
    %1861 = vmatprep.subr.mxu0 0.0
    %1862 = vmatpush2.msra.mxu0 0.0
    %1863 = vmatprep.subr.mxu0 0.0
    %1864 = vmatpush2.msra.mxu0 0.0
    %1865 = vmatprep.subr.mxu0 0.0
    %1866 = vmatpush2.msra.mxu0 0.0
    %1867 = vmatprep.subr.mxu0 0.0
    %1868 = vmatpush2.msra.mxu0 0.0
    %1869 = vmatprep.subr.mxu0 0.0
    %1870 = vmatpush2.msra.mxu0 0.0
    %1871 = vmatprep.subr.mxu0 0.0
    %1872 = vmatpush2.msra.mxu0 0.0
    %1873 = vmatprep.subr.mxu0 0.0
    %1874 = vmatpush2.msra.mxu0 0.0
    %1875 = vmatprep.subr.mxu0 0.0
    %1876 = vmatpush2.msra.mxu0 0.0
    %1877 = vmatprep.subr.mxu0 0.0
    %1878 = vmatpush2.msra.mxu0 0.0
    %1879 = vmatprep.subr.mxu0 0.0
    %1880 = vmatpush2.msra.mxu0 0.0
    %1881 = vmatprep.subr.mxu0 0.0
    %1882 = vmatpush2.msra.mxu0 0.0
    %1883 = vmatprep.subr.mxu0 0.0
    %1884 = vmatpush2.msra.mxu0 0.0
    %1885 = vmatprep.subr.mxu0 0.0
    %1886 = vmatpush2.msra.mxu0 0.0
    %1887 = vmatprep.subr.mxu0 0.0
    %1888 = vmatpush2.msra.mxu0 0.0
    %1889 = vmatprep.subr.mxu0 0.0
    %1890 = vmatpush2.msra.mxu0 0.0
    %1891 = vmatprep.mubr.f32.mxu0 0.0
    %1892 = vmatmul.mubr.f32.gmra.mxu0 %v1825
    %v1893 = vpop.f32.mrf.mxu0
    %v1894 = vadd.f32 0.0, %v1893
    %v1895 = vpop.f32.mrf.mxu0
    %1896 = vdwg.mxu0
    %v1898 = vsel %vm975, %v1645, 0
    %1900 = vmatprep.subr.mxu0 0.0
    %1901 = vmatpush1.msra.mxu0 0.0
    %1902 = vmatprep.subr.mxu0 0.0
    %1903 = vmatpush1.msra.mxu0 0.0
    %1904 = vmatprep.subr.mxu0 0.0
    %1905 = vmatpush1.msra.mxu0 0.0
    %1906 = vmatprep.subr.mxu0 0.0
    %1907 = vmatpush1.msra.mxu0 0.0
    %1908 = vmatprep.subr.mxu0 0.0
    %1909 = vmatpush1.msra.mxu0 0.0
    %1910 = vmatprep.subr.mxu0 0.0
    %1911 = vmatpush1.msra.mxu0 0.0
    %1912 = vmatprep.subr.mxu0 0.0
    %1913 = vmatpush1.msra.mxu0 0.0
    %1914 = vmatprep.subr.mxu0 0.0
    %1915 = vmatpush1.msra.mxu0 0.0
    %1916 = vmatprep.subr.mxu0 0.0
    %1917 = vmatpush1.msra.mxu0 0.0
    %1918 = vmatprep.subr.mxu0 0.0
    %1919 = vmatpush1.msra.mxu0 0.0
    %1920 = vmatprep.subr.mxu0 0.0
    %1921 = vmatpush1.msra.mxu0 0.0
    %1922 = vmatprep.subr.mxu0 0.0
    %1923 = vmatpush1.msra.mxu0 0.0
    %1924 = vmatprep.subr.mxu0 0.0
    %1925 = vmatpush1.msra.mxu0 0.0
    %1926 = vmatprep.subr.mxu0 0.0
    %1927 = vmatpush1.msra.mxu0 0.0
    %1928 = vmatprep.subr.mxu0 0.0
    %1929 = vmatpush1.msra.mxu0 0.0
    %1930 = vmatprep.subr.mxu0 0.0
    %1931 = vmatpush1.msra.mxu0 %v822
    %1932 = vmatprep.subr.mxu0 0.0
    %1933 = vmatpush2.msra.mxu0 0.0
    %1934 = vmatprep.subr.mxu0 0.0
    %1935 = vmatpush2.msra.mxu0 0.0
    %1936 = vmatprep.subr.mxu0 0.0
    %1937 = vmatpush2.msra.mxu0 0.0
    %1938 = vmatprep.subr.mxu0 0.0
    %1939 = vmatpush2.msra.mxu0 0.0
    %1940 = vmatprep.subr.mxu0 0.0
    %1941 = vmatpush2.msra.mxu0 0.0
    %1942 = vmatprep.subr.mxu0 0.0
    %1943 = vmatpush2.msra.mxu0 0.0
    %1944 = vmatprep.subr.mxu0 0.0
    %1945 = vmatpush2.msra.mxu0 0.0
    %1946 = vmatprep.subr.mxu0 0.0
    %1947 = vmatpush2.msra.mxu0 0.0
    %1948 = vmatprep.subr.mxu0 0.0
    %1949 = vmatpush2.msra.mxu0 0.0
    %1950 = vmatprep.subr.mxu0 0.0
    %1951 = vmatpush2.msra.mxu0 0.0
    %1952 = vmatprep.subr.mxu0 0.0
    %1953 = vmatpush2.msra.mxu0 0.0
    %1954 = vmatprep.subr.mxu0 0.0
    %1955 = vmatpush2.msra.mxu0 0.0
    %1956 = vmatprep.subr.mxu0 0.0
    %1957 = vmatpush2.msra.mxu0 0.0
    %1958 = vmatprep.subr.mxu0 0.0
    %1959 = vmatpush2.msra.mxu0 0.0
    %1960 = vmatprep.subr.mxu0 0.0
    %1961 = vmatpush2.msra.mxu0 0.0
    %1962 = vmatprep.subr.mxu0 0.0
    %1963 = vmatpush2.msra.mxu0 0.0
    %1964 = vmatprep.mubr.f32.mxu0 0.0
    %1965 = vmatmul.mubr.f32.gmra.mxu0 %v1898
    %v1966 = vpop.f32.mrf.mxu0
    %v1967 = vadd.f32 0.0, %v1966
    %v1968 = vpop.f32.mrf.mxu0
    %1969 = vdwg.mxu0
    %v1971 = vsel %vm975, %v1647, 0
    %1973 = vmatprep.subr.mxu0 0.0
    %1974 = vmatpush1.msra.mxu0 0.0
    %1975 = vmatprep.subr.mxu0 0.0
    %1976 = vmatpush1.msra.mxu0 0.0
    %1977 = vmatprep.subr.mxu0 0.0
    %1978 = vmatpush1.msra.mxu0 0.0
    %1979 = vmatprep.subr.mxu0 0.0
    %1980 = vmatpush1.msra.mxu0 0.0
    %1981 = vmatprep.subr.mxu0 0.0
    %1982 = vmatpush1.msra.mxu0 0.0
    %1983 = vmatprep.subr.mxu0 0.0
    %1984 = vmatpush1.msra.mxu0 0.0
    %1985 = vmatprep.subr.mxu0 0.0
    %1986 = vmatpush1.msra.mxu0 0.0
    %1987 = vmatprep.subr.mxu0 0.0
    %1988 = vmatpush1.msra.mxu0 0.0
    %1989 = vmatprep.subr.mxu0 0.0
    %1990 = vmatpush1.msra.mxu0 0.0
    %1991 = vmatprep.subr.mxu0 0.0
    %1992 = vmatpush1.msra.mxu0 0.0
    %1993 = vmatprep.subr.mxu0 0.0
    %1994 = vmatpush1.msra.mxu0 0.0
    %1995 = vmatprep.subr.mxu0 0.0
    %1996 = vmatpush1.msra.mxu0 0.0
    %1997 = vmatprep.subr.mxu0 0.0
    %1998 = vmatpush1.msra.mxu0 0.0
    %1999 = vmatprep.subr.mxu0 0.0
    %2000 = vmatpush1.msra.mxu0 0.0
    %2001 = vmatprep.subr.mxu0 0.0
    %2002 = vmatpush1.msra.mxu0 0.0
    %2003 = vmatprep.subr.mxu0 0.0
    %2004 = vmatpush1.msra.mxu0 %v892
    %2005 = vmatprep.subr.mxu0 0.0
    %2006 = vmatpush2.msra.mxu0 0.0
    %2007 = vmatprep.subr.mxu0 0.0
    %2008 = vmatpush2.msra.mxu0 0.0
    %2009 = vmatprep.subr.mxu0 0.0
    %2010 = vmatpush2.msra.mxu0 0.0
    %2011 = vmatprep.subr.mxu0 0.0
    %2012 = vmatpush2.msra.mxu0 0.0
    %2013 = vmatprep.subr.mxu0 0.0
    %2014 = vmatpush2.msra.mxu0 0.0
    %2015 = vmatprep.subr.mxu0 0.0
    %2016 = vmatpush2.msra.mxu0 0.0
    %2017 = vmatprep.subr.mxu0 0.0
    %2018 = vmatpush2.msra.mxu0 0.0
    %2019 = vmatprep.subr.mxu0 0.0
    %2020 = vmatpush2.msra.mxu0 0.0
    %2021 = vmatprep.subr.mxu0 0.0
    %2022 = vmatpush2.msra.mxu0 0.0
    %2023 = vmatprep.subr.mxu0 0.0
    %2024 = vmatpush2.msra.mxu0 0.0
    %2025 = vmatprep.subr.mxu0 0.0
    %2026 = vmatpush2.msra.mxu0 0.0
    %2027 = vmatprep.subr.mxu0 0.0
    %2028 = vmatpush2.msra.mxu0 0.0
    %2029 = vmatprep.subr.mxu0 0.0
    %2030 = vmatpush2.msra.mxu0 0.0
    %2031 = vmatprep.subr.mxu0 0.0
    %2032 = vmatpush2.msra.mxu0 0.0
    %2033 = vmatprep.subr.mxu0 0.0
    %2034 = vmatpush2.msra.mxu0 0.0
    %2035 = vmatprep.subr.mxu0 0.0
    %2036 = vmatpush2.msra.mxu0 0.0
    %2037 = vmatprep.mubr.f32.mxu0 0.0
    %2038 = vmatmul.mubr.f32.gmra.mxu0 %v1971
    %v2039 = vpop.f32.mrf.mxu0
    %v2040 = vadd.f32 0.0, %v2039
    %v2041 = vpop.f32.mrf.mxu0
    %2042 = vdwg.mxu0
    %v2044 = vsel %vm975, %v1649, 0
    %2046 = vmatprep.subr.mxu0 0.0
    %2047 = vmatpush1.msra.mxu0 0.0
    %2048 = vmatprep.subr.mxu0 0.0
    %2049 = vmatpush1.msra.mxu0 0.0
    %2050 = vmatprep.subr.mxu0 0.0
    %2051 = vmatpush1.msra.mxu0 0.0
    %2052 = vmatprep.subr.mxu0 0.0
    %2053 = vmatpush1.msra.mxu0 0.0
    %2054 = vmatprep.subr.mxu0 0.0
    %2055 = vmatpush1.msra.mxu0 0.0
    %2056 = vmatprep.subr.mxu0 0.0
    %2057 = vmatpush1.msra.mxu0 0.0
    %2058 = vmatprep.subr.mxu0 0.0
    %2059 = vmatpush1.msra.mxu0 0.0
    %2060 = vmatprep.subr.mxu0 0.0
    %2061 = vmatpush1.msra.mxu0 0.0
    %2062 = vmatprep.subr.mxu0 0.0
    %2063 = vmatpush1.msra.mxu0 0.0
    %2064 = vmatprep.subr.mxu0 0.0
    %2065 = vmatpush1.msra.mxu0 0.0
    %2066 = vmatprep.subr.mxu0 0.0
    %2067 = vmatpush1.msra.mxu0 0.0
    %2068 = vmatprep.subr.mxu0 0.0
    %2069 = vmatpush1.msra.mxu0 0.0
    %2070 = vmatprep.subr.mxu0 0.0
    %2071 = vmatpush1.msra.mxu0 0.0
    %2072 = vmatprep.subr.mxu0 0.0
    %2073 = vmatpush1.msra.mxu0 0.0
    %2074 = vmatprep.subr.mxu0 0.0
    %2075 = vmatpush1.msra.mxu0 0.0
    %2076 = vmatprep.subr.mxu0 0.0
    %2077 = vmatpush1.msra.mxu0 %v897
    %2078 = vmatprep.subr.mxu0 0.0
    %2079 = vmatpush2.msra.mxu0 0.0
    %2080 = vmatprep.subr.mxu0 0.0
    %2081 = vmatpush2.msra.mxu0 0.0
    %2082 = vmatprep.subr.mxu0 0.0
    %2083 = vmatpush2.msra.mxu0 0.0
    %2084 = vmatprep.subr.mxu0 0.0
    %2085 = vmatpush2.msra.mxu0 0.0
    %2086 = vmatprep.subr.mxu0 0.0
    %2087 = vmatpush2.msra.mxu0 0.0
    %2088 = vmatprep.subr.mxu0 0.0
    %2089 = vmatpush2.msra.mxu0 0.0
    %2090 = vmatprep.subr.mxu0 0.0
    %2091 = vmatpush2.msra.mxu0 0.0
    %2092 = vmatprep.subr.mxu0 0.0
    %2093 = vmatpush2.msra.mxu0 0.0
    %2094 = vmatprep.subr.mxu0 0.0
    %2095 = vmatpush2.msra.mxu0 0.0
    %2096 = vmatprep.subr.mxu0 0.0
    %2097 = vmatpush2.msra.mxu0 0.0
    %2098 = vmatprep.subr.mxu0 0.0
    %2099 = vmatpush2.msra.mxu0 0.0
    %2100 = vmatprep.subr.mxu0 0.0
    %2101 = vmatpush2.msra.mxu0 0.0
    %2102 = vmatprep.subr.mxu0 0.0
    %2103 = vmatpush2.msra.mxu0 0.0
    %2104 = vmatprep.subr.mxu0 0.0
    %2105 = vmatpush2.msra.mxu0 0.0
    %2106 = vmatprep.subr.mxu0 0.0
    %2107 = vmatpush2.msra.mxu0 0.0
    %2108 = vmatprep.subr.mxu0 0.0
    %2109 = vmatpush2.msra.mxu0 0.0
    %2110 = vmatprep.mubr.f32.mxu0 0.0
    %2111 = vmatmul.mubr.f32.gmra.mxu0 %v2044
    %v2112 = vpop.f32.mrf.mxu0
    %v2113 = vadd.f32 0.0, %v2112
    %v2114 = vpop.f32.mrf.mxu0
    %2115 = vdwg.mxu0
    %v2117 = vsel %vm975, %v1651, 0
    %2119 = vmatprep.subr.mxu0 0.0
    %2120 = vmatpush1.msra.mxu0 0.0
    %2121 = vmatprep.subr.mxu0 0.0
    %2122 = vmatpush1.msra.mxu0 0.0
    %2123 = vmatprep.subr.mxu0 0.0
    %2124 = vmatpush1.msra.mxu0 0.0
    %2125 = vmatprep.subr.mxu0 0.0
    %2126 = vmatpush1.msra.mxu0 0.0
    %2127 = vmatprep.subr.mxu0 0.0
    %2128 = vmatpush1.msra.mxu0 0.0
    %2129 = vmatprep.subr.mxu0 0.0
    %2130 = vmatpush1.msra.mxu0 0.0
    %2131 = vmatprep.subr.mxu0 0.0
    %2132 = vmatpush1.msra.mxu0 0.0
    %2133 = vmatprep.subr.mxu0 0.0
    %2134 = vmatpush1.msra.mxu0 0.0
    %2135 = vmatprep.subr.mxu0 0.0
    %2136 = vmatpush1.msra.mxu0 0.0
    %2137 = vmatprep.subr.mxu0 0.0
    %2138 = vmatpush1.msra.mxu0 0.0
    %2139 = vmatprep.subr.mxu0 0.0
    %2140 = vmatpush1.msra.mxu0 0.0
    %2141 = vmatprep.subr.mxu0 0.0
    %2142 = vmatpush1.msra.mxu0 0.0
    %2143 = vmatprep.subr.mxu0 0.0
    %2144 = vmatpush1.msra.mxu0 0.0
    %2145 = vmatprep.subr.mxu0 0.0
    %2146 = vmatpush1.msra.mxu0 0.0
    %2147 = vmatprep.subr.mxu0 0.0
    %2148 = vmatpush1.msra.mxu0 0.0
    %2149 = vmatprep.subr.mxu0 0.0
    %2150 = vmatpush1.msra.mxu0 %v967
    %2151 = vmatprep.subr.mxu0 0.0
    %2152 = vmatpush2.msra.mxu0 0.0
    %2153 = vmatprep.subr.mxu0 0.0
    %2154 = vmatpush2.msra.mxu0 0.0
    %2155 = vmatprep.subr.mxu0 0.0
    %2156 = vmatpush2.msra.mxu0 0.0
    %2157 = vmatprep.subr.mxu0 0.0
    %2158 = vmatpush2.msra.mxu0 0.0
    %2159 = vmatprep.subr.mxu0 0.0
    %2160 = vmatpush2.msra.mxu0 0.0
    %2161 = vmatprep.subr.mxu0 0.0
    %2162 = vmatpush2.msra.mxu0 0.0
    %2163 = vmatprep.subr.mxu0 0.0
    %2164 = vmatpush2.msra.mxu0 0.0
    %2165 = vmatprep.subr.mxu0 0.0
    %2166 = vmatpush2.msra.mxu0 0.0
    %2167 = vmatprep.subr.mxu0 0.0
    %2168 = vmatpush2.msra.mxu0 0.0
    %2169 = vmatprep.subr.mxu0 0.0
    %2170 = vmatpush2.msra.mxu0 0.0
    %2171 = vmatprep.subr.mxu0 0.0
    %2172 = vmatpush2.msra.mxu0 0.0
    %2173 = vmatprep.subr.mxu0 0.0
    %2174 = vmatpush2.msra.mxu0 0.0
    %2175 = vmatprep.subr.mxu0 0.0
    %2176 = vmatpush2.msra.mxu0 0.0
    %2177 = vmatprep.subr.mxu0 0.0
    %2178 = vmatpush2.msra.mxu0 0.0
    %2179 = vmatprep.subr.mxu0 0.0
    %2180 = vmatpush2.msra.mxu0 0.0
    %2181 = vmatprep.subr.mxu0 0.0
    %2182 = vmatpush2.msra.mxu0 0.0
    %2183 = vmatprep.mubr.f32.mxu0 0.0
    %2184 = vmatmul.mubr.f32.gmra.mxu0 %v2117
    %v2185 = vpop.f32.mrf.mxu0
    %v2186 = vadd.f32 0.0, %v2185
    %v2187 = vpop.f32.mrf.mxu0
    %2188 = vdwg.mxu0
    %v2190 = vsel %vm975, %v1653, 0
    %2192 = vmatprep.subr.mxu0 0.0
    %2193 = vmatpush1.msra.mxu0 0.0
    %2194 = vmatprep.subr.mxu0 0.0
    %2195 = vmatpush1.msra.mxu0 0.0
    %2196 = vmatprep.subr.mxu0 0.0
    %2197 = vmatpush1.msra.mxu0 0.0
    %2198 = vmatprep.subr.mxu0 0.0
    %2199 = vmatpush1.msra.mxu0 0.0
    %2200 = vmatprep.subr.mxu0 0.0
    %2201 = vmatpush1.msra.mxu0 0.0
    %2202 = vmatprep.subr.mxu0 0.0
    %2203 = vmatpush1.msra.mxu0 0.0
    %2204 = vmatprep.subr.mxu0 0.0
    %2205 = vmatpush1.msra.mxu0 0.0
    %2206 = vmatprep.subr.mxu0 0.0
    %2207 = vmatpush1.msra.mxu0 0.0
    %2208 = vmatprep.subr.mxu0 0.0
    %2209 = vmatpush1.msra.mxu0 0.0
    %2210 = vmatprep.subr.mxu0 0.0
    %2211 = vmatpush1.msra.mxu0 0.0
    %2212 = vmatprep.subr.mxu0 0.0
    %2213 = vmatpush1.msra.mxu0 0.0
    %2214 = vmatprep.subr.mxu0 0.0
    %2215 = vmatpush1.msra.mxu0 0.0
    %2216 = vmatprep.subr.mxu0 0.0
    %2217 = vmatpush1.msra.mxu0 0.0
    %2218 = vmatprep.subr.mxu0 0.0
    %2219 = vmatpush1.msra.mxu0 0.0
    %2220 = vmatprep.subr.mxu0 0.0
    %2221 = vmatpush1.msra.mxu0 0.0
    %2222 = vmatprep.subr.mxu0 0.0
    %2223 = vmatpush1.msra.mxu0 %v972
    %2224 = vmatprep.subr.mxu0 0.0
    %2225 = vmatpush2.msra.mxu0 0.0
    %2226 = vmatprep.subr.mxu0 0.0
    %2227 = vmatpush2.msra.mxu0 0.0
    %2228 = vmatprep.subr.mxu0 0.0
    %2229 = vmatpush2.msra.mxu0 0.0
    %2230 = vmatprep.subr.mxu0 0.0
    %2231 = vmatpush2.msra.mxu0 0.0
    %2232 = vmatprep.subr.mxu0 0.0
    %2233 = vmatpush2.msra.mxu0 0.0
    %2234 = vmatprep.subr.mxu0 0.0
    %2235 = vmatpush2.msra.mxu0 0.0
    %2236 = vmatprep.subr.mxu0 0.0
    %2237 = vmatpush2.msra.mxu0 0.0
    %2238 = vmatprep.subr.mxu0 0.0
    %2239 = vmatpush2.msra.mxu0 0.0
    %2240 = vmatprep.subr.mxu0 0.0
    %2241 = vmatpush2.msra.mxu0 0.0
    %2242 = vmatprep.subr.mxu0 0.0
    %2243 = vmatpush2.msra.mxu0 0.0
    %2244 = vmatprep.subr.mxu0 0.0
    %2245 = vmatpush2.msra.mxu0 0.0
    %2246 = vmatprep.subr.mxu0 0.0
    %2247 = vmatpush2.msra.mxu0 0.0
    %2248 = vmatprep.subr.mxu0 0.0
    %2249 = vmatpush2.msra.mxu0 0.0
    %2250 = vmatprep.subr.mxu0 0.0
    %2251 = vmatpush2.msra.mxu0 0.0
    %2252 = vmatprep.subr.mxu0 0.0
    %2253 = vmatpush2.msra.mxu0 0.0
    %2254 = vmatprep.subr.mxu0 0.0
    %2255 = vmatpush2.msra.mxu0 0.0
    %2256 = vmatprep.mubr.f32.mxu0 0.0
    %2257 = vmatmul.mubr.f32.gmra.mxu0 %v2190
    %v2258 = vpop.f32.mrf.mxu0
    %v2259 = vadd.f32 0.0, %v2258
    %v2260 = vpop.f32.mrf.mxu0
    %2261 = vdwg.mxu0
    %v2262 = vrcp.pop %v1656
    %v2263 = vrcp.pop %v1659
    %v2264 = vrcp.pop %v1662
    %v2265 = vrcp.pop %v1665
    %v2266 = vrcp.pop %v1668
    %v2267 = vrcp.pop %v1671
    %v2268 = vrcp.pop %v1674
    %v2269 = vrcp.pop %v1677
    %v2270 = vmul.f32 %v1748, %v2262
    %v2271 = vmul.f32 %v1821, %v2263
    %v2272 = vmul.f32 %v1894, %v2264
    %v2273 = vmul.f32 %v1967, %v2265
    %v2274 = vmul.f32 %v2040, %v2266
    %v2275 = vmul.f32 %v2113, %v2267
    %v2276 = vmul.f32 %v2186, %v2268
    %v2277 = vmul.f32 %v2259, %v2269
    %v2278 = vld [vmem:[%s2] sm:$0xff]
    %v2279 = vld [vmem:[%s2 + $0x8] sm:$0xff]
    %v2280 = vld [vmem:[%s2 + $0x10] sm:$0xff]
    %v2281 = vld [vmem:[%s2 + $0x18] sm:$0xff]
    %v2283 = vsel %vm975, %v2270, 0
    %v2286 = vsel %vm975, %v2271, 0
    %2288 = vmatprep.subr.mxu0 0.0
    %2289 = vmatpush1.msra.mxu0 0.0
    %2290 = vmatprep.subr.mxu0 0.0
    %2291 = vmatpush1.msra.mxu0 0.0
    %2292 = vmatprep.subr.mxu0 0.0
    %2293 = vmatpush1.msra.mxu0 0.0
    %2294 = vmatprep.subr.mxu0 0.0
    %2295 = vmatpush1.msra.mxu0 0.0
    %2296 = vmatprep.subr.mxu0 0.0
    %2297 = vmatpush1.msra.mxu0 0.0
    %2298 = vmatprep.subr.mxu0 0.0
    %2299 = vmatpush1.msra.mxu0 0.0
    %2300 = vmatprep.subr.mxu0 0.0
    %2301 = vmatpush1.msra.mxu0 0.0
    %2302 = vmatprep.subr.mxu0 0.0
    %2303 = vmatpush1.msra.mxu0 0.0
    %2304 = vmatprep.subr.mxu0 0.0
    %2305 = vmatpush1.msra.mxu0 0.0
    %2306 = vmatprep.subr.mxu0 0.0
    %2307 = vmatpush1.msra.mxu0 0.0
    %2308 = vmatprep.subr.mxu0 0.0
    %2309 = vmatpush1.msra.mxu0 0.0
    %2310 = vmatprep.subr.mxu0 0.0
    %2311 = vmatpush1.msra.mxu0 0.0
    %2312 = vmatprep.subr.mxu0 0.0
    %2313 = vmatpush1.msra.mxu0 0.0
    %2314 = vmatprep.subr.mxu0 0.0
    %2315 = vmatpush1.msra.mxu0 0.0
    %2316 = vmatprep.subr.mxu0 0.0
    %2317 = vmatpush1.msra.mxu0 0.0
    %2318 = vmatprep.subr.mxu0 0.0
    %2319 = vmatpush1.msra.mxu0 %v2278
    %2320 = vmatprep.subr.mxu0 0.0
    %2321 = vmatpush2.msra.mxu0 0.0
    %2322 = vmatprep.subr.mxu0 0.0
    %2323 = vmatpush2.msra.mxu0 0.0
    %2324 = vmatprep.subr.mxu0 0.0
    %2325 = vmatpush2.msra.mxu0 0.0
    %2326 = vmatprep.subr.mxu0 0.0
    %2327 = vmatpush2.msra.mxu0 0.0
    %2328 = vmatprep.subr.mxu0 0.0
    %2329 = vmatpush2.msra.mxu0 0.0
    %2330 = vmatprep.subr.mxu0 0.0
    %2331 = vmatpush2.msra.mxu0 0.0
    %2332 = vmatprep.subr.mxu0 0.0
    %2333 = vmatpush2.msra.mxu0 0.0
    %2334 = vmatprep.subr.mxu0 0.0
    %2335 = vmatpush2.msra.mxu0 0.0
    %2336 = vmatprep.subr.mxu0 0.0
    %2337 = vmatpush2.msra.mxu0 0.0
    %2338 = vmatprep.subr.mxu0 0.0
    %2339 = vmatpush2.msra.mxu0 0.0
    %2340 = vmatprep.subr.mxu0 0.0
    %2341 = vmatpush2.msra.mxu0 0.0
    %2342 = vmatprep.subr.mxu0 0.0
    %2343 = vmatpush2.msra.mxu0 0.0
    %2344 = vmatprep.subr.mxu0 0.0
    %2345 = vmatpush2.msra.mxu0 0.0
    %2346 = vmatprep.subr.mxu0 0.0
    %2347 = vmatpush2.msra.mxu0 0.0
    %2348 = vmatprep.subr.mxu0 0.0
    %2349 = vmatpush2.msra.mxu0 0.0
    %2350 = vmatprep.subr.mxu0 0.0
    %2351 = vmatpush2.msra.mxu0 0.0
    %2352 = vmatprep.mubr.f32.mxu0 0.0
    %2353 = vmatmul.mubr.f32.gmra.mxu0 %v2283
    %v2354 = vpop.f32.mrf.mxu0
    %v2355 = vadd.f32 0.0, %v2354
    %v2356 = vpop.f32.mrf.mxu0
    %2357 = vmatprep.mubr.f32.mxu0 0.0
    %2358 = vmatmul.mubr.f32.gmra.mxu0 %v2286
    %v2359 = vpop.f32.mrf.mxu0
    %v2360 = vadd.f32 0.0, %v2359
    %v2361 = vpop.f32.mrf.mxu0
    %2362 = vdwg.mxu0
    %v2364 = vsel %vm975, %v2272, 0
    %v2367 = vsel %vm975, %v2273, 0
    %2369 = vmatprep.subr.mxu0 0.0
    %2370 = vmatpush1.msra.mxu0 0.0
    %2371 = vmatprep.subr.mxu0 0.0
    %2372 = vmatpush1.msra.mxu0 0.0
    %2373 = vmatprep.subr.mxu0 0.0
    %2374 = vmatpush1.msra.mxu0 0.0
    %2375 = vmatprep.subr.mxu0 0.0
    %2376 = vmatpush1.msra.mxu0 0.0
    %2377 = vmatprep.subr.mxu0 0.0
    %2378 = vmatpush1.msra.mxu0 0.0
    %2379 = vmatprep.subr.mxu0 0.0
    %2380 = vmatpush1.msra.mxu0 0.0
    %2381 = vmatprep.subr.mxu0 0.0
    %2382 = vmatpush1.msra.mxu0 0.0
    %2383 = vmatprep.subr.mxu0 0.0
    %2384 = vmatpush1.msra.mxu0 0.0
    %2385 = vmatprep.subr.mxu0 0.0
    %2386 = vmatpush1.msra.mxu0 0.0
    %2387 = vmatprep.subr.mxu0 0.0
    %2388 = vmatpush1.msra.mxu0 0.0
    %2389 = vmatprep.subr.mxu0 0.0
    %2390 = vmatpush1.msra.mxu0 0.0
    %2391 = vmatprep.subr.mxu0 0.0
    %2392 = vmatpush1.msra.mxu0 0.0
    %2393 = vmatprep.subr.mxu0 0.0
    %2394 = vmatpush1.msra.mxu0 0.0
    %2395 = vmatprep.subr.mxu0 0.0
    %2396 = vmatpush1.msra.mxu0 0.0
    %2397 = vmatprep.subr.mxu0 0.0
    %2398 = vmatpush1.msra.mxu0 0.0
    %2399 = vmatprep.subr.mxu0 0.0
    %2400 = vmatpush1.msra.mxu0 %v2279
    %2401 = vmatprep.subr.mxu0 0.0
    %2402 = vmatpush2.msra.mxu0 0.0
    %2403 = vmatprep.subr.mxu0 0.0
    %2404 = vmatpush2.msra.mxu0 0.0
    %2405 = vmatprep.subr.mxu0 0.0
    %2406 = vmatpush2.msra.mxu0 0.0
    %2407 = vmatprep.subr.mxu0 0.0
    %2408 = vmatpush2.msra.mxu0 0.0
    %2409 = vmatprep.subr.mxu0 0.0
    %2410 = vmatpush2.msra.mxu0 0.0
    %2411 = vmatprep.subr.mxu0 0.0
    %2412 = vmatpush2.msra.mxu0 0.0
    %2413 = vmatprep.subr.mxu0 0.0
    %2414 = vmatpush2.msra.mxu0 0.0
    %2415 = vmatprep.subr.mxu0 0.0
    %2416 = vmatpush2.msra.mxu0 0.0
    %2417 = vmatprep.subr.mxu0 0.0
    %2418 = vmatpush2.msra.mxu0 0.0
    %2419 = vmatprep.subr.mxu0 0.0
    %2420 = vmatpush2.msra.mxu0 0.0
    %2421 = vmatprep.subr.mxu0 0.0
    %2422 = vmatpush2.msra.mxu0 0.0
    %2423 = vmatprep.subr.mxu0 0.0
    %2424 = vmatpush2.msra.mxu0 0.0
    %2425 = vmatprep.subr.mxu0 0.0
    %2426 = vmatpush2.msra.mxu0 0.0
    %2427 = vmatprep.subr.mxu0 0.0
    %2428 = vmatpush2.msra.mxu0 0.0
    %2429 = vmatprep.subr.mxu0 0.0
    %2430 = vmatpush2.msra.mxu0 0.0
    %2431 = vmatprep.subr.mxu0 0.0
    %2432 = vmatpush2.msra.mxu0 0.0
    %2433 = vmatprep.mubr.f32.mxu0 0.0
    %2434 = vmatmul.mubr.f32.gmra.mxu0 %v2364
    %v2435 = vpop.f32.mrf.mxu0
    %v2436 = vadd.f32 0.0, %v2435
    %v2437 = vpop.f32.mrf.mxu0
    %2438 = vmatprep.mubr.f32.mxu0 0.0
    %2439 = vmatmul.mubr.f32.gmra.mxu0 %v2367
    %v2440 = vpop.f32.mrf.mxu0
    %v2441 = vadd.f32 0.0, %v2440
    %v2442 = vpop.f32.mrf.mxu0
    %2443 = vdwg.mxu0
    %v2445 = vsel %vm975, %v2274, 0
    %v2448 = vsel %vm975, %v2275, 0
    %2450 = vmatprep.subr.mxu0 0.0
    %2451 = vmatpush1.msra.mxu0 0.0
    %2452 = vmatprep.subr.mxu0 0.0
    %2453 = vmatpush1.msra.mxu0 0.0
    %2454 = vmatprep.subr.mxu0 0.0
    %2455 = vmatpush1.msra.mxu0 0.0
    %2456 = vmatprep.subr.mxu0 0.0
    %2457 = vmatpush1.msra.mxu0 0.0
    %2458 = vmatprep.subr.mxu0 0.0
    %2459 = vmatpush1.msra.mxu0 0.0
    %2460 = vmatprep.subr.mxu0 0.0
    %2461 = vmatpush1.msra.mxu0 0.0
    %2462 = vmatprep.subr.mxu0 0.0
    %2463 = vmatpush1.msra.mxu0 0.0
    %2464 = vmatprep.subr.mxu0 0.0
    %2465 = vmatpush1.msra.mxu0 0.0
    %2466 = vmatprep.subr.mxu0 0.0
    %2467 = vmatpush1.msra.mxu0 0.0
    %2468 = vmatprep.subr.mxu0 0.0
    %2469 = vmatpush1.msra.mxu0 0.0
    %2470 = vmatprep.subr.mxu0 0.0
    %2471 = vmatpush1.msra.mxu0 0.0
    %2472 = vmatprep.subr.mxu0 0.0
    %2473 = vmatpush1.msra.mxu0 0.0
    %2474 = vmatprep.subr.mxu0 0.0
    %2475 = vmatpush1.msra.mxu0 0.0
    %2476 = vmatprep.subr.mxu0 0.0
    %2477 = vmatpush1.msra.mxu0 0.0
    %2478 = vmatprep.subr.mxu0 0.0
    %2479 = vmatpush1.msra.mxu0 0.0
    %2480 = vmatprep.subr.mxu0 0.0
    %2481 = vmatpush1.msra.mxu0 %v2280
    %2482 = vmatprep.subr.mxu0 0.0
    %2483 = vmatpush2.msra.mxu0 0.0
    %2484 = vmatprep.subr.mxu0 0.0
    %2485 = vmatpush2.msra.mxu0 0.0
    %2486 = vmatprep.subr.mxu0 0.0
    %2487 = vmatpush2.msra.mxu0 0.0
    %2488 = vmatprep.subr.mxu0 0.0
    %2489 = vmatpush2.msra.mxu0 0.0
    %2490 = vmatprep.subr.mxu0 0.0
    %2491 = vmatpush2.msra.mxu0 0.0
    %2492 = vmatprep.subr.mxu0 0.0
    %2493 = vmatpush2.msra.mxu0 0.0
    %2494 = vmatprep.subr.mxu0 0.0
    %2495 = vmatpush2.msra.mxu0 0.0
    %2496 = vmatprep.subr.mxu0 0.0
    %2497 = vmatpush2.msra.mxu0 0.0
    %2498 = vmatprep.subr.mxu0 0.0
    %2499 = vmatpush2.msra.mxu0 0.0
    %2500 = vmatprep.subr.mxu0 0.0
    %2501 = vmatpush2.msra.mxu0 0.0
    %2502 = vmatprep.subr.mxu0 0.0
    %2503 = vmatpush2.msra.mxu0 0.0
    %2504 = vmatprep.subr.mxu0 0.0
    %2505 = vmatpush2.msra.mxu0 0.0
    %2506 = vmatprep.subr.mxu0 0.0
    %2507 = vmatpush2.msra.mxu0 0.0
    %2508 = vmatprep.subr.mxu0 0.0
    %2509 = vmatpush2.msra.mxu0 0.0
    %2510 = vmatprep.subr.mxu0 0.0
    %2511 = vmatpush2.msra.mxu0 0.0
    %2512 = vmatprep.subr.mxu0 0.0
    %2513 = vmatpush2.msra.mxu0 0.0
    %2514 = vmatprep.mubr.f32.mxu0 0.0
    %2515 = vmatmul.mubr.f32.gmra.mxu0 %v2445
    %v2516 = vpop.f32.mrf.mxu0
    %v2517 = vadd.f32 0.0, %v2516
    %v2518 = vpop.f32.mrf.mxu0
    %2519 = vmatprep.mubr.f32.mxu0 0.0
    %2520 = vmatmul.mubr.f32.gmra.mxu0 %v2448
    %v2521 = vpop.f32.mrf.mxu0
    %v2522 = vadd.f32 0.0, %v2521
    %v2523 = vpop.f32.mrf.mxu0
    %2524 = vdwg.mxu0
    %v2526 = vsel %vm975, %v2276, 0
    %v2529 = vsel %vm975, %v2277, 0
    %2531 = vmatprep.subr.mxu0 0.0
    %2532 = vmatpush1.msra.mxu0 0.0
    %2533 = vmatprep.subr.mxu0 0.0
    %2534 = vmatpush1.msra.mxu0 0.0
    %2535 = vmatprep.subr.mxu0 0.0
    %2536 = vmatpush1.msra.mxu0 0.0
    %2537 = vmatprep.subr.mxu0 0.0
    %2538 = vmatpush1.msra.mxu0 0.0
    %2539 = vmatprep.subr.mxu0 0.0
    %2540 = vmatpush1.msra.mxu0 0.0
    %2541 = vmatprep.subr.mxu0 0.0
    %2542 = vmatpush1.msra.mxu0 0.0
    %2543 = vmatprep.subr.mxu0 0.0
    %2544 = vmatpush1.msra.mxu0 0.0
    %2545 = vmatprep.subr.mxu0 0.0
    %2546 = vmatpush1.msra.mxu0 0.0
    %2547 = vmatprep.subr.mxu0 0.0
    %2548 = vmatpush1.msra.mxu0 0.0
    %2549 = vmatprep.subr.mxu0 0.0
    %2550 = vmatpush1.msra.mxu0 0.0
    %2551 = vmatprep.subr.mxu0 0.0
    %2552 = vmatpush1.msra.mxu0 0.0
    %2553 = vmatprep.subr.mxu0 0.0
    %2554 = vmatpush1.msra.mxu0 0.0
    %2555 = vmatprep.subr.mxu0 0.0
    %2556 = vmatpush1.msra.mxu0 0.0
    %2557 = vmatprep.subr.mxu0 0.0
    %2558 = vmatpush1.msra.mxu0 0.0
    %2559 = vmatprep.subr.mxu0 0.0
    %2560 = vmatpush1.msra.mxu0 0.0
    %2561 = vmatprep.subr.mxu0 0.0
    %2562 = vmatpush1.msra.mxu0 %v2281
    %2563 = vmatprep.subr.mxu0 0.0
    %2564 = vmatpush2.msra.mxu0 0.0
    %2565 = vmatprep.subr.mxu0 0.0
    %2566 = vmatpush2.msra.mxu0 0.0
    %2567 = vmatprep.subr.mxu0 0.0
    %2568 = vmatpush2.msra.mxu0 0.0
    %2569 = vmatprep.subr.mxu0 0.0
    %2570 = vmatpush2.msra.mxu0 0.0
    %2571 = vmatprep.subr.mxu0 0.0
    %2572 = vmatpush2.msra.mxu0 0.0
    %2573 = vmatprep.subr.mxu0 0.0
    %2574 = vmatpush2.msra.mxu0 0.0
    %2575 = vmatprep.subr.mxu0 0.0
    %2576 = vmatpush2.msra.mxu0 0.0
    %2577 = vmatprep.subr.mxu0 0.0
    %2578 = vmatpush2.msra.mxu0 0.0
    %2579 = vmatprep.subr.mxu0 0.0
    %2580 = vmatpush2.msra.mxu0 0.0
    %2581 = vmatprep.subr.mxu0 0.0
    %2582 = vmatpush2.msra.mxu0 0.0
    %2583 = vmatprep.subr.mxu0 0.0
    %2584 = vmatpush2.msra.mxu0 0.0
    %2585 = vmatprep.subr.mxu0 0.0
    %2586 = vmatpush2.msra.mxu0 0.0
    %2587 = vmatprep.subr.mxu0 0.0
    %2588 = vmatpush2.msra.mxu0 0.0
    %2589 = vmatprep.subr.mxu0 0.0
    %2590 = vmatpush2.msra.mxu0 0.0
    %2591 = vmatprep.subr.mxu0 0.0
    %2592 = vmatpush2.msra.mxu0 0.0
    %2593 = vmatprep.subr.mxu0 0.0
    %2594 = vmatpush2.msra.mxu0 0.0
    %2595 = vmatprep.mubr.f32.mxu0 0.0
    %2596 = vmatmul.mubr.f32.gmra.mxu0 %v2526
    %v2597 = vpop.f32.mrf.mxu0
    %v2598 = vadd.f32 0.0, %v2597
    %v2599 = vpop.f32.mrf.mxu0
    %2600 = vmatprep.mubr.f32.mxu0 0.0
    %2601 = vmatmul.mubr.f32.gmra.mxu0 %v2529
    %v2602 = vpop.f32.mrf.mxu0
    %v2603 = vadd.f32 0.0, %v2602
    %v2604 = vpop.f32.mrf.mxu0
    %2605 = vdwg.mxu0
    %v2606 = vadd.f32 %v2355, %v2436
    %v2607 = vadd.f32 %v2606, %v2517
    %v2608 = vadd.f32 %v2607, %v2598
    %v2609 = vadd.f32 %v2360, %v2441
    %v2610 = vadd.f32 %v2609, %v2522
    %v2611 = vadd.f32 %v2610, %v2603
    %v2612 = vld [vmem:[%s3] sm:$0x1]
    %v2614 = vlaneseq
    %v2615 = vshrl.u32 %v2614, 7
    %v2616 = vsub.s32 0, %v2615
    %v2617 = vrot.slane %v2612, %v2616
    %v2619 = vadd.f32 %v2608, %v2617
    %v2620 = vadd.f32 %v2611, %v2617
    %2621 = vst [vmem:[#allocation2] sm:$0xff] %v2619
    %2622 = vst [vmem:[#allocation2 + $0x8] sm:$0xff] %v2620
    // Predicated region
    $region18: #{tpu_custom_call.1} parent=1 // pred_check
      _
    $region19: #{tpu_custom_call.1} parent=1 // pred_check_branch
      %2624 = sbr.rel (0) target = $region21
    $region20: #{tpu_custom_call.1} parent=1 // pred_region
      %s2626 = ssub.s32 256, 256
      %2627 = vsyncadd [#allocation3], %s2626
      %s2628 = sshll.u32 [#allocation2], 4
      %s2629 = int_to_ptr.vmem [resolvable:$true] %s2628
      %2634 = dma.vmem_to_hbm [thread:$0]  %s2629, 256, %s4, [#allocation3], 128, 128, 8
    $region21: #{tpu_custom_call.1} parent=1 // pred_fallthru
      _
    // Predicated region
    $region22: #{tpu_custom_call.1} parent=1 // pred_check
      _
    $region23: #{tpu_custom_call.1} parent=1 // pred_check_branch
      %2636 = sbr.rel (0) target = $region25
    $region24: #{tpu_custom_call.1} parent=1 // pred_region
      %2637 = dma.done [#allocation3], 256
    $region25: #{tpu_custom_call.1} parent=1 // pred_fallthru
      _
    %2638 = vsyncpa [#allocation3], 1

</llo_original>
